<compile_context>
chip_gen: v5e
topology: v5e:2x2
jax: 0.10.0
libtpu: 0.0.40
codegen_flags: <defaults>
</compile_context>

<pallas_src>
import functools
import math

import jax
import jax.numpy as jnp
from jax.experimental import pallas as pl
from jax.experimental.pallas import tpu as pltpu


def temporal_attention_kernel(q_ref, k_ref, v_ref,
                              wq_ref, bq_ref, wk_ref, bk_ref, wv_ref, bv_ref,
                              wp_ref, bp_ref, o_ref, ctx_ref,
                              *, num_heads, d_k, n_blk, t_q, t_k):
    f32 = jnp.float32
    bf16 = jnp.bfloat16
    d = num_heads * d_k

    xq = q_ref[0]                      # (n_blk * t_q, d)  node-major rows
    xk = k_ref[0]                      # (n_blk * t_k, d)
    xv = v_ref[0]                      # (n_blk * t_k, d)

    # Fused QKV projections over all rows of the tile: bf16 MXU operands with
    # f32 accumulation, bias added in f32.  The 1/sqrt(d_k) attention scale is
    # pre-folded into wq/bq by the wrapper, so there is no per-score scaling.
    Q = jnp.dot(xq.astype(bf16), wq_ref[...].astype(bf16),
                preferred_element_type=f32) + bq_ref[...]
    K = jnp.dot(xk.astype(bf16), wk_ref[...].astype(bf16),
                preferred_element_type=f32) + bk_ref[...]
    V = jnp.dot(xv.astype(bf16), wv_ref[...].astype(bf16),
                preferred_element_type=f32) + bv_ref[...]

    # Rows are node-major, so splitting the leading (sublane) dim into
    # (node, time) is a cheap row-block reshape (free when t is a multiple of 8).
    Qb = Q.reshape(n_blk, t_q, d).astype(bf16)
    Kb = K.reshape(n_blk, t_k, d).astype(bf16)
    Vb = V.reshape(n_blk, t_k, d).astype(bf16)

    # num_heads == 4 -> static unroll is fine; per-head temporaries are fully
    # overwritten each iteration.  (For many heads, switch to lax.fori_loop with
    # pl.ds lane slices to bound live ranges, per perf review.)
    for h in range(num_heads):
        sl = slice(h * d_k, (h + 1) * d_k)
        qh = Qb[:, :, sl]                               # (n_blk, t_q, d_k)
        kh = Kb[:, :, sl]                               # (n_blk, t_k, d_k)
        vh = Vb[:, :, sl]                               # (n_blk, t_k, d_k)
        # Exact per-node scores: leading-batch batched matmul, no mask needed.
        s = jnp.einsum('nqd,nkd->nqk', qh, kh,
                       preferred_element_type=f32)      # (n_blk, t_q, t_k)
        s = s - jnp.max(s, axis=-1, keepdims=True)      # stable softmax (f32)
        p = jnp.exp(s)
        attn = p * pl.reciprocal(jnp.sum(p, axis=-1, keepdims=True), approx=True)
        # Write this head's context into its lane slice of the f32 scratch.
        ctx_ref[:, :, sl] = jnp.einsum('nqk,nkd->nqd', attn.astype(bf16), vh,
                                       preferred_element_type=f32)

    # Single output projection with contraction K = d (good MXU fill) instead of
    # num_heads skinny K = d_k matmuls.
    ctx = ctx_ref[...].reshape(n_blk * t_q, d)
    out = jnp.dot(ctx.astype(bf16), wp_ref[...].astype(bf16),
                  preferred_element_type=f32) + bp_ref[...]
    # TODO(synk): attn_drop / proj_drop with p > 0 (dropout) not implemented;
    #             identity at the module default p = 0.
    # TODO(synk): optional `mask` argument (masked_fill -1e9) not implemented;
    #             the reference forward is exercised with mask=None.
    o_ref[0] = out.astype(o_ref.dtype)


def _pick_node_tile(n, t_q, t_k, target_rows=1024):
    """Largest divisor of n whose row count fits the target and keeps the
    (8, 128) block constraint / free row-block reshapes (rows % 8 == 0)."""
    divisors = [c for c in range(1, n + 1) if n % c == 0]
    aligned = [c for c in divisors
               if ((c * t_q) % 8 == 0 and (c * t_k) % 8 == 0) or c == n]
    fitting = [c for c in aligned if max(c * t_q, c * t_k) <= target_rows]
    if fitting:
        return max(fitting)
    return min(aligned) if aligned else n


def temporal_attention(query, key, value, params, num_heads):
    """query/key/value: (b, t, n, d) in the PyTorch module's axis convention."""
    b, t_q, n, d = query.shape
    t_k = key.shape[1]
    assert d % num_heads == 0
    d_k = d // num_heads
    wq, bq, wk, bk, wv, bv, wp, bp = params     # weights (d,d) in->out; biases (1,d)

    # Fold the 1/sqrt(d_k) attention scale into the query projection at trace
    # time (constant fold on the small (d, d) weight).
    scale = 1.0 / math.sqrt(d_k)
    wq_s = wq * scale
    bq_s = bq * scale

    # Node-major layout: one XLA copy per operand so each node's time series is
    # a contiguous row block -> exact per-node attention in the kernel, no
    # cross-node masking and no n x score over-compute.
    qf = jnp.transpose(query, (0, 2, 1, 3)).reshape(b, n * t_q, d)
    kf = jnp.transpose(key, (0, 2, 1, 3)).reshape(b, n * t_k, d)
    vf = jnp.transpose(value, (0, 2, 1, 3)).reshape(b, n * t_k, d)

    n_blk = _pick_node_tile(n, t_q, t_k)
    n_tiles = n // n_blk

    kernel = functools.partial(
        temporal_attention_kernel,
        num_heads=num_heads, d_k=d_k, n_blk=n_blk, t_q=t_q, t_k=t_k)

    q_spec = pl.BlockSpec((1, n_blk * t_q, d), lambda i, j: (i, j, 0))
    kv_spec = pl.BlockSpec((1, n_blk * t_k, d), lambda i, j: (i, j, 0))
    w_spec = pl.BlockSpec((d, d), lambda i, j: (0, 0))
    b_spec = pl.BlockSpec((1, d), lambda i, j: (0, 0))
    o_spec = pl.BlockSpec((1, n_blk * t_q, d), lambda i, j: (i, j, 0))

    # Generation-aware VMEM budget: 3/4 of physical VMEM (64 MiB on v7x,
    # 128 MiB on v5e/v6e), capped at 100 MiB; conservative fallback otherwise.
    try:
        vmem_cap = pltpu.get_tpu_info().vmem_capacity_bytes
        vmem_limit = min(int(vmem_cap) * 3 // 4, 100 * 1024 * 1024)
    except Exception:
        vmem_limit = 48 * 1024 * 1024

    out = pl.pallas_call(
        kernel,
        out_shape=jax.ShapeDtypeStruct((b, n * t_q, d), query.dtype),
        grid_spec=pltpu.PrefetchScalarGridSpec(
            num_scalar_prefetch=0,
            grid=(b, n_tiles),
            in_specs=[q_spec, kv_spec, kv_spec,
                      w_spec, b_spec, w_spec, b_spec, w_spec, b_spec,
                      w_spec, b_spec],
            out_specs=o_spec,
            scratch_shapes=[pltpu.VMEM((n_blk, t_q, d), jnp.float32)]),
        compiler_params=pltpu.CompilerParams(
            dimension_semantics=("parallel", "parallel"),
            vmem_limit_bytes=vmem_limit),
    )(qf, kf, vf, wq_s, bq_s, wk, bk, wv, bv, wp, bp)

    # Back to the module's (b, t, n, d) convention.
    return out.reshape(b, n, t_q, d).transpose(0, 2, 1, 3)


def reference(query, key, value, params, num_heads):
    """Pure-JAX f32 replica of the PyTorch forward, for validation."""
    wq, bq, wk, bk, wv, bv, wp, bp = params
    b, t_q, n, d = query.shape
    t_k = key.shape[1]
    d_k = d // num_heads
    Q = query @ wq + bq
    K = key @ wk + bk
    V = value @ wv + bv
    Q = Q.reshape(b, t_q, n, num_heads, d_k).transpose(0, 3, 2, 1, 4)
    K = K.reshape(b, t_k, n, num_heads, d_k).transpose(0, 3, 2, 1, 4)
    V = V.reshape(b, t_k, n, num_heads, d_k).transpose(0, 3, 2, 1, 4)
    scores = jnp.einsum('bhnqd,bhnkd->bhnqk', Q, K) / math.sqrt(d_k)
    attn = jax.nn.softmax(scores, axis=-1)
    x = jnp.einsum('bhnqk,bhnkd->bhnqd', attn, V)
    x = x.transpose(0, 3, 2, 1, 4).reshape(b, t_q, n, d)
    return x @ wp + bp


if __name__ == "__main__":
    B, T, N, DIM, HEADS = 2, 8, 4, 32, 4

    root = jax.random.PRNGKey(0)
    ks = jax.random.split(root, 11)
    scale = 1.0 / math.sqrt(DIM)

    def _w(k):
        return jax.random.normal(k, (DIM, DIM), jnp.float32) * scale

    def _b(k):
        return jax.random.normal(k, (1, DIM), jnp.float32) * scale

    params = (_w(ks[0]), _b(ks[1]),   # wq, bq
              _w(ks[2]), _b(ks[3]),   # wk, bk
              _w(ks[4]), _b(ks[5]),   # wv, bv
              _w(ks[6]), _b(ks[7]))   # wp, bp

    query = jax.random.normal(ks[8], (B, T, N, DIM), jnp.float32)
    key = jax.random.normal(ks[9], (B, T, N, DIM), jnp.float32)
    value = jax.random.normal(ks[10], (B, T, N, DIM), jnp.float32)

    out = temporal_attention(query, key, value, params, HEADS)
    out = jax.block_until_ready(out)

    ref = reference(query, key, value, params, HEADS)
    assert out.shape == (B, T, N, DIM), out.shape
    # bf16 MXU operands (f32 accumulation) + approx reciprocal -> loosened
    # tolerance vs the f32 reference.
    assert jnp.allclose(out, ref, atol=5e-2, rtol=5e-2), \
        f"max err {jnp.max(jnp.abs(out - ref))}"

    print("KERNEL_OK")
</pallas_src>

<mosaic_0001>
module attributes {stable_mosaic.version = 11 : i64} {
  func.func @temporal_attention_kernel(%arg0: i32, %arg1: i32, %arg2: memref<1x32x32xf32, #tpu.memory_space<vmem>>, %arg3: memref<1x32x32xf32, #tpu.memory_space<vmem>>, %arg4: memref<1x32x32xf32, #tpu.memory_space<vmem>>, %arg5: memref<32x32xf32, #tpu.memory_space<vmem>>, %arg6: memref<1x32xf32, #tpu.memory_space<vmem>>, %arg7: memref<32x32xf32, #tpu.memory_space<vmem>>, %arg8: memref<1x32xf32, #tpu.memory_space<vmem>>, %arg9: memref<32x32xf32, #tpu.memory_space<vmem>>, %arg10: memref<1x32xf32, #tpu.memory_space<vmem>>, %arg11: memref<32x32xf32, #tpu.memory_space<vmem>>, %arg12: memref<1x32xf32, #tpu.memory_space<vmem>>, %arg13: memref<1x32x32xf32, #tpu.memory_space<vmem>>, %arg14: memref<4x8x32xf32, #tpu.memory_space<vmem>>) attributes {dimension_semantics = [#tpu.dimension_semantics<parallel>, #tpu.dimension_semantics<parallel>], iteration_bounds = array<i64: 2, 1>, scalar_prefetch = 0 : i64, scratch_operands = 1 : i64, tpu.core_type = #tpu.core_type<tc>, window_params = [{transform_indices = @transform_0, window_bounds = array<i64: 1, 32, 32>}, {transform_indices = @transform_1, window_bounds = array<i64: 1, 32, 32>}, {transform_indices = @transform_2, window_bounds = array<i64: 1, 32, 32>}, {pipeline_mode = #tpu.pipeline_mode<synchronous>, transform_indices = @transform_3, window_bounds = array<i64: 32, 32>}, {pipeline_mode = #tpu.pipeline_mode<synchronous>, transform_indices = @transform_4, window_bounds = array<i64: 1, 32>}, {pipeline_mode = #tpu.pipeline_mode<synchronous>, transform_indices = @transform_5, window_bounds = array<i64: 32, 32>}, {pipeline_mode = #tpu.pipeline_mode<synchronous>, transform_indices = @transform_6, window_bounds = array<i64: 1, 32>}, {pipeline_mode = #tpu.pipeline_mode<synchronous>, transform_indices = @transform_7, window_bounds = array<i64: 32, 32>}, {pipeline_mode = #tpu.pipeline_mode<synchronous>, transform_indices = @transform_8, window_bounds = array<i64: 1, 32>}, {pipeline_mode = #tpu.pipeline_mode<synchronous>, transform_indices = @transform_9, window_bounds = array<i64: 32, 32>}, {pipeline_mode = #tpu.pipeline_mode<synchronous>, transform_indices = @transform_10, window_bounds = array<i64: 1, 32>}, {transform_indices = @transform_11, window_bounds = array<i64: 1, 32, 32>}]} {
    %c0 = arith.constant 0 : index
    %c0_0 = arith.constant 0 : index
    %c0_1 = arith.constant 0 : index
    %0 = vector.load %arg2[%c0, %c0_0, %c0_1] : memref<1x32x32xf32, #tpu.memory_space<vmem>>, vector<1x32x32xf32>
    %1 = vector.shape_cast %0 : vector<1x32x32xf32> to vector<32x32xf32>
    %c0_2 = arith.constant 0 : index
    %c0_3 = arith.constant 0 : index
    %c0_4 = arith.constant 0 : index
    %2 = vector.load %arg3[%c0_2, %c0_3, %c0_4] : memref<1x32x32xf32, #tpu.memory_space<vmem>>, vector<1x32x32xf32>
    %3 = vector.shape_cast %2 : vector<1x32x32xf32> to vector<32x32xf32>
    %c0_5 = arith.constant 0 : index
    %c0_6 = arith.constant 0 : index
    %c0_7 = arith.constant 0 : index
    %4 = vector.load %arg4[%c0_5, %c0_6, %c0_7] : memref<1x32x32xf32, #tpu.memory_space<vmem>>, vector<1x32x32xf32>
    %5 = vector.shape_cast %4 : vector<1x32x32xf32> to vector<32x32xf32>
    %6 = arith.truncf %1 : vector<32x32xf32> to vector<32x32xbf16>
    %c0_8 = arith.constant 0 : index
    %c0_9 = arith.constant 0 : index
    %7 = vector.load %arg5[%c0_8, %c0_9] : memref<32x32xf32, #tpu.memory_space<vmem>>, vector<32x32xf32>
    %8 = arith.truncf %7 : vector<32x32xf32> to vector<32x32xbf16>
    %cst = arith.constant dense<0.000000e+00> : vector<32x32xf32>
    %9 = tpu.matmul %6, %8, %cst {dimension_numbers = #tpu.dot_dimension_numbers<[1], [0], [0], [1], [0, 0, 1, 1], [], []>} : vector<32x32xbf16>, vector<32x32xbf16>, vector<32x32xf32> -> vector<32x32xf32>
    %c0_10 = arith.constant 0 : index
    %c0_11 = arith.constant 0 : index
    %10 = vector.load %arg6[%c0_10, %c0_11] : memref<1x32xf32, #tpu.memory_space<vmem>>, vector<1x32xf32>
    %11 = vector.broadcast %10 : vector<1x32xf32> to vector<32x32xf32>
    %12 = arith.addf %9, %11 : vector<32x32xf32>
    %13 = arith.truncf %3 : vector<32x32xf32> to vector<32x32xbf16>
    %c0_12 = arith.constant 0 : index
    %c0_13 = arith.constant 0 : index
    %14 = vector.load %arg7[%c0_12, %c0_13] : memref<32x32xf32, #tpu.memory_space<vmem>>, vector<32x32xf32>
    %15 = arith.truncf %14 : vector<32x32xf32> to vector<32x32xbf16>
    %cst_14 = arith.constant dense<0.000000e+00> : vector<32x32xf32>
    %16 = tpu.matmul %13, %15, %cst_14 {dimension_numbers = #tpu.dot_dimension_numbers<[1], [0], [0], [1], [0, 0, 1, 1], [], []>} : vector<32x32xbf16>, vector<32x32xbf16>, vector<32x32xf32> -> vector<32x32xf32>
    %c0_15 = arith.constant 0 : index
    %c0_16 = arith.constant 0 : index
    %17 = vector.load %arg8[%c0_15, %c0_16] : memref<1x32xf32, #tpu.memory_space<vmem>>, vector<1x32xf32>
    %18 = vector.broadcast %17 : vector<1x32xf32> to vector<32x32xf32>
    %19 = arith.addf %16, %18 : vector<32x32xf32>
    %20 = arith.truncf %5 : vector<32x32xf32> to vector<32x32xbf16>
    %c0_17 = arith.constant 0 : index
    %c0_18 = arith.constant 0 : index
    %21 = vector.load %arg9[%c0_17, %c0_18] : memref<32x32xf32, #tpu.memory_space<vmem>>, vector<32x32xf32>
    %22 = arith.truncf %21 : vector<32x32xf32> to vector<32x32xbf16>
    %cst_19 = arith.constant dense<0.000000e+00> : vector<32x32xf32>
    %23 = tpu.matmul %20, %22, %cst_19 {dimension_numbers = #tpu.dot_dimension_numbers<[1], [0], [0], [1], [0, 0, 1, 1], [], []>} : vector<32x32xbf16>, vector<32x32xbf16>, vector<32x32xf32> -> vector<32x32xf32>
    %c0_20 = arith.constant 0 : index
    %c0_21 = arith.constant 0 : index
    %24 = vector.load %arg10[%c0_20, %c0_21] : memref<1x32xf32, #tpu.memory_space<vmem>>, vector<1x32xf32>
    %25 = vector.broadcast %24 : vector<1x32xf32> to vector<32x32xf32>
    %26 = arith.addf %23, %25 : vector<32x32xf32>
    %27 = vector.shape_cast %12 : vector<32x32xf32> to vector<4x8x32xf32>
    %28 = arith.truncf %27 : vector<4x8x32xf32> to vector<4x8x32xbf16>
    %29 = vector.shape_cast %19 : vector<32x32xf32> to vector<4x8x32xf32>
    %30 = arith.truncf %29 : vector<4x8x32xf32> to vector<4x8x32xbf16>
    %31 = vector.shape_cast %26 : vector<32x32xf32> to vector<4x8x32xf32>
    %32 = arith.truncf %31 : vector<4x8x32xf32> to vector<4x8x32xbf16>
    %33 = vector.extract_strided_slice %28 {offsets = [0, 0, 0], sizes = [4, 8, 8], strides = [1, 1, 1]} : vector<4x8x32xbf16> to vector<4x8x8xbf16>
    %34 = vector.extract_strided_slice %30 {offsets = [0, 0, 0], sizes = [4, 8, 8], strides = [1, 1, 1]} : vector<4x8x32xbf16> to vector<4x8x8xbf16>
    %35 = vector.extract_strided_slice %32 {offsets = [0, 0, 0], sizes = [4, 8, 8], strides = [1, 1, 1]} : vector<4x8x32xbf16> to vector<4x8x8xbf16>
    "tpu.trace_start"() <{level = 10 : i32, message = "nqd,nkd->nqk"}> : () -> ()
    %cst_22 = arith.constant dense<0.000000e+00> : vector<4x8x8xf32>
    %36 = tpu.matmul %33, %34, %cst_22 {dimension_numbers = #tpu.dot_dimension_numbers<[2], [2], [1], [1], [0, 0, 0, 1, 1, 1], [0], [0]>} : vector<4x8x8xbf16>, vector<4x8x8xbf16>, vector<4x8x8xf32> -> vector<4x8x8xf32>
    "tpu.trace_stop"() : () -> ()
    %cst_23 = arith.constant dense<0xFF800000> : vector<4x8xf32>
    %37 = vector.multi_reduction <maximumf>, %36, %cst_23 [2] : vector<4x8x8xf32> to vector<4x8xf32>
    %38 = vector.shape_cast %37 : vector<4x8xf32> to vector<4x8x1xf32>
    %39 = vector.broadcast %38 : vector<4x8x1xf32> to vector<4x8x8xf32>
    %40 = arith.subf %36, %39 : vector<4x8x8xf32>
    %41 = math.exp %40 : vector<4x8x8xf32>
    %cst_24 = arith.constant dense<0.000000e+00> : vector<4x8xf32>
    %42 = vector.multi_reduction <add>, %41, %cst_24 [2] : vector<4x8x8xf32> to vector<4x8xf32>
    %43 = vector.shape_cast %42 : vector<4x8xf32> to vector<4x8x1xf32>
    %44 = tpu.reciprocal %43 {approx = true} : vector<4x8x1xf32> -> vector<4x8x1xf32>
    %45 = vector.broadcast %44 : vector<4x8x1xf32> to vector<4x8x8xf32>
    %46 = arith.mulf %41, %45 : vector<4x8x8xf32>
    %47 = arith.truncf %46 : vector<4x8x8xf32> to vector<4x8x8xbf16>
    "tpu.trace_start"() <{level = 10 : i32, message = "nqk,nkd->nqd"}> : () -> ()
    %cst_25 = arith.constant dense<0.000000e+00> : vector<4x8x8xf32>
    %48 = tpu.matmul %47, %35, %cst_25 {dimension_numbers = #tpu.dot_dimension_numbers<[2], [1], [1], [2], [0, 0, 0, 1, 1, 2], [0], [0]>} : vector<4x8x8xbf16>, vector<4x8x8xbf16>, vector<4x8x8xf32> -> vector<4x8x8xf32>
    "tpu.trace_stop"() : () -> ()
    %c0_26 = arith.constant 0 : index
    %c0_27 = arith.constant 0 : index
    %c0_28 = arith.constant 0 : index
    %49 = vector.load %arg14[%c0_26, %c0_27, %c0_28] : memref<4x8x32xf32, #tpu.memory_space<vmem>>, vector<4x8x8xf32>
    tpu.vector_store %arg14[%c0_26, %c0_27, %c0_28], %48 {strides = array<i32>} : memref<4x8x32xf32, #tpu.memory_space<vmem>>, vector<4x8x8xf32>,
    %50 = vector.extract_strided_slice %28 {offsets = [0, 0, 8], sizes = [4, 8, 8], strides = [1, 1, 1]} : vector<4x8x32xbf16> to vector<4x8x8xbf16>
    %51 = vector.extract_strided_slice %30 {offsets = [0, 0, 8], sizes = [4, 8, 8], strides = [1, 1, 1]} : vector<4x8x32xbf16> to vector<4x8x8xbf16>
    %52 = vector.extract_strided_slice %32 {offsets = [0, 0, 8], sizes = [4, 8, 8], strides = [1, 1, 1]} : vector<4x8x32xbf16> to vector<4x8x8xbf16>
    "tpu.trace_start"() <{level = 10 : i32, message = "nqd,nkd->nqk"}> : () -> ()
    %cst_29 = arith.constant dense<0.000000e+00> : vector<4x8x8xf32>
    %53 = tpu.matmul %50, %51, %cst_29 {dimension_numbers = #tpu.dot_dimension_numbers<[2], [2], [1], [1], [0, 0, 0, 1, 1, 1], [0], [0]>} : vector<4x8x8xbf16>, vector<4x8x8xbf16>, vector<4x8x8xf32> -> vector<4x8x8xf32>
    "tpu.trace_stop"() : () -> ()
    %cst_30 = arith.constant dense<0xFF800000> : vector<4x8xf32>
    %54 = vector.multi_reduction <maximumf>, %53, %cst_30 [2] : vector<4x8x8xf32> to vector<4x8xf32>
    %55 = vector.shape_cast %54 : vector<4x8xf32> to vector<4x8x1xf32>
    %56 = vector.broadcast %55 : vector<4x8x1xf32> to vector<4x8x8xf32>
    %57 = arith.subf %53, %56 : vector<4x8x8xf32>
    %58 = math.exp %57 : vector<4x8x8xf32>
    %cst_31 = arith.constant dense<0.000000e+00> : vector<4x8xf32>
    %59 = vector.multi_reduction <add>, %58, %cst_31 [2] : vector<4x8x8xf32> to vector<4x8xf32>
    %60 = vector.shape_cast %59 : vector<4x8xf32> to vector<4x8x1xf32>
    %61 = tpu.reciprocal %60 {approx = true} : vector<4x8x1xf32> -> vector<4x8x1xf32>
    %62 = vector.broadcast %61 : vector<4x8x1xf32> to vector<4x8x8xf32>
    %63 = arith.mulf %58, %62 : vector<4x8x8xf32>
    %64 = arith.truncf %63 : vector<4x8x8xf32> to vector<4x8x8xbf16>
    "tpu.trace_start"() <{level = 10 : i32, message = "nqk,nkd->nqd"}> : () -> ()
    %cst_32 = arith.constant dense<0.000000e+00> : vector<4x8x8xf32>
    %65 = tpu.matmul %64, %52, %cst_32 {dimension_numbers = #tpu.dot_dimension_numbers<[2], [1], [1], [2], [0, 0, 0, 1, 1, 2], [0], [0]>} : vector<4x8x8xbf16>, vector<4x8x8xbf16>, vector<4x8x8xf32> -> vector<4x8x8xf32>
    "tpu.trace_stop"() : () -> ()
    %c0_33 = arith.constant 0 : index
    %c0_34 = arith.constant 0 : index
    %c8 = arith.constant 8 : index
    %66 = vector.load %arg14[%c0_33, %c0_34, %c8] : memref<4x8x32xf32, #tpu.memory_space<vmem>>, vector<4x8x8xf32>
    tpu.vector_store %arg14[%c0_33, %c0_34, %c8], %65 {strides = array<i32>} : memref<4x8x32xf32, #tpu.memory_space<vmem>>, vector<4x8x8xf32>,
    %67 = vector.extract_strided_slice %28 {offsets = [0, 0, 16], sizes = [4, 8, 8], strides = [1, 1, 1]} : vector<4x8x32xbf16> to vector<4x8x8xbf16>
    %68 = vector.extract_strided_slice %30 {offsets = [0, 0, 16], sizes = [4, 8, 8], strides = [1, 1, 1]} : vector<4x8x32xbf16> to vector<4x8x8xbf16>
    %69 = vector.extract_strided_slice %32 {offsets = [0, 0, 16], sizes = [4, 8, 8], strides = [1, 1, 1]} : vector<4x8x32xbf16> to vector<4x8x8xbf16>
    "tpu.trace_start"() <{level = 10 : i32, message = "nqd,nkd->nqk"}> : () -> ()
    %cst_35 = arith.constant dense<0.000000e+00> : vector<4x8x8xf32>
    %70 = tpu.matmul %67, %68, %cst_35 {dimension_numbers = #tpu.dot_dimension_numbers<[2], [2], [1], [1], [0, 0, 0, 1, 1, 1], [0], [0]>} : vector<4x8x8xbf16>, vector<4x8x8xbf16>, vector<4x8x8xf32> -> vector<4x8x8xf32>
    "tpu.trace_stop"() : () -> ()
    %cst_36 = arith.constant dense<0xFF800000> : vector<4x8xf32>
    %71 = vector.multi_reduction <maximumf>, %70, %cst_36 [2] : vector<4x8x8xf32> to vector<4x8xf32>
    %72 = vector.shape_cast %71 : vector<4x8xf32> to vector<4x8x1xf32>
    %73 = vector.broadcast %72 : vector<4x8x1xf32> to vector<4x8x8xf32>
    %74 = arith.subf %70, %73 : vector<4x8x8xf32>
    %75 = math.exp %74 : vector<4x8x8xf32>
    %cst_37 = arith.constant dense<0.000000e+00> : vector<4x8xf32>
    %76 = vector.multi_reduction <add>, %75, %cst_37 [2] : vector<4x8x8xf32> to vector<4x8xf32>
    %77 = vector.shape_cast %76 : vector<4x8xf32> to vector<4x8x1xf32>
    %78 = tpu.reciprocal %77 {approx = true} : vector<4x8x1xf32> -> vector<4x8x1xf32>
    %79 = vector.broadcast %78 : vector<4x8x1xf32> to vector<4x8x8xf32>
    %80 = arith.mulf %75, %79 : vector<4x8x8xf32>
    %81 = arith.truncf %80 : vector<4x8x8xf32> to vector<4x8x8xbf16>
    "tpu.trace_start"() <{level = 10 : i32, message = "nqk,nkd->nqd"}> : () -> ()
    %cst_38 = arith.constant dense<0.000000e+00> : vector<4x8x8xf32>
    %82 = tpu.matmul %81, %69, %cst_38 {dimension_numbers = #tpu.dot_dimension_numbers<[2], [1], [1], [2], [0, 0, 0, 1, 1, 2], [0], [0]>} : vector<4x8x8xbf16>, vector<4x8x8xbf16>, vector<4x8x8xf32> -> vector<4x8x8xf32>
    "tpu.trace_stop"() : () -> ()
    %c0_39 = arith.constant 0 : index
    %c0_40 = arith.constant 0 : index
    %c16 = arith.constant 16 : index
    %83 = vector.load %arg14[%c0_39, %c0_40, %c16] : memref<4x8x32xf32, #tpu.memory_space<vmem>>, vector<4x8x8xf32>
    tpu.vector_store %arg14[%c0_39, %c0_40, %c16], %82 {strides = array<i32>} : memref<4x8x32xf32, #tpu.memory_space<vmem>>, vector<4x8x8xf32>,
    %84 = vector.extract_strided_slice %28 {offsets = [0, 0, 24], sizes = [4, 8, 8], strides = [1, 1, 1]} : vector<4x8x32xbf16> to vector<4x8x8xbf16>
    %85 = vector.extract_strided_slice %30 {offsets = [0, 0, 24], sizes = [4, 8, 8], strides = [1, 1, 1]} : vector<4x8x32xbf16> to vector<4x8x8xbf16>
    %86 = vector.extract_strided_slice %32 {offsets = [0, 0, 24], sizes = [4, 8, 8], strides = [1, 1, 1]} : vector<4x8x32xbf16> to vector<4x8x8xbf16>
    "tpu.trace_start"() <{level = 10 : i32, message = "nqd,nkd->nqk"}> : () -> ()
    %cst_41 = arith.constant dense<0.000000e+00> : vector<4x8x8xf32>
    %87 = tpu.matmul %84, %85, %cst_41 {dimension_numbers = #tpu.dot_dimension_numbers<[2], [2], [1], [1], [0, 0, 0, 1, 1, 1], [0], [0]>} : vector<4x8x8xbf16>, vector<4x8x8xbf16>, vector<4x8x8xf32> -> vector<4x8x8xf32>
    "tpu.trace_stop"() : () -> ()
    %cst_42 = arith.constant dense<0xFF800000> : vector<4x8xf32>
    %88 = vector.multi_reduction <maximumf>, %87, %cst_42 [2] : vector<4x8x8xf32> to vector<4x8xf32>
    %89 = vector.shape_cast %88 : vector<4x8xf32> to vector<4x8x1xf32>
    %90 = vector.broadcast %89 : vector<4x8x1xf32> to vector<4x8x8xf32>
    %91 = arith.subf %87, %90 : vector<4x8x8xf32>
    %92 = math.exp %91 : vector<4x8x8xf32>
    %cst_43 = arith.constant dense<0.000000e+00> : vector<4x8xf32>
    %93 = vector.multi_reduction <add>, %92, %cst_43 [2] : vector<4x8x8xf32> to vector<4x8xf32>
    %94 = vector.shape_cast %93 : vector<4x8xf32> to vector<4x8x1xf32>
    %95 = tpu.reciprocal %94 {approx = true} : vector<4x8x1xf32> -> vector<4x8x1xf32>
    %96 = vector.broadcast %95 : vector<4x8x1xf32> to vector<4x8x8xf32>
    %97 = arith.mulf %92, %96 : vector<4x8x8xf32>
    %98 = arith.truncf %97 : vector<4x8x8xf32> to vector<4x8x8xbf16>
    "tpu.trace_start"() <{level = 10 : i32, message = "nqk,nkd->nqd"}> : () -> ()
    %cst_44 = arith.constant dense<0.000000e+00> : vector<4x8x8xf32>
    %99 = tpu.matmul %98, %86, %cst_44 {dimension_numbers = #tpu.dot_dimension_numbers<[2], [1], [1], [2], [0, 0, 0, 1, 1, 2], [0], [0]>} : vector<4x8x8xbf16>, vector<4x8x8xbf16>, vector<4x8x8xf32> -> vector<4x8x8xf32>
    "tpu.trace_stop"() : () -> ()
    %c0_45 = arith.constant 0 : index
    %c0_46 = arith.constant 0 : index
    %c24 = arith.constant 24 : index
    %100 = vector.load %arg14[%c0_45, %c0_46, %c24] : memref<4x8x32xf32, #tpu.memory_space<vmem>>, vector<4x8x8xf32>
    tpu.vector_store %arg14[%c0_45, %c0_46, %c24], %99 {strides = array<i32>} : memref<4x8x32xf32, #tpu.memory_space<vmem>>, vector<4x8x8xf32>,
    %c0_47 = arith.constant 0 : index
    %c0_48 = arith.constant 0 : index
    %c0_49 = arith.constant 0 : index
    %101 = vector.load %arg14[%c0_47, %c0_48, %c0_49] : memref<4x8x32xf32, #tpu.memory_space<vmem>>, vector<4x8x32xf32>
    %102 = vector.shape_cast %101 : vector<4x8x32xf32> to vector<32x32xf32>
    %103 = arith.truncf %102 : vector<32x32xf32> to vector<32x32xbf16>
    %c0_50 = arith.constant 0 : index
    %c0_51 = arith.constant 0 : index
    %104 = vector.load %arg11[%c0_50, %c0_51] : memref<32x32xf32, #tpu.memory_space<vmem>>, vector<32x32xf32>
    %105 = arith.truncf %104 : vector<32x32xf32> to vector<32x32xbf16>
    %cst_52 = arith.constant dense<0.000000e+00> : vector<32x32xf32>
    %106 = tpu.matmul %103, %105, %cst_52 {dimension_numbers = #tpu.dot_dimension_numbers<[1], [0], [0], [1], [0, 0, 1, 1], [], []>} : vector<32x32xbf16>, vector<32x32xbf16>, vector<32x32xf32> -> vector<32x32xf32>
    %c0_53 = arith.constant 0 : index
    %c0_54 = arith.constant 0 : index
    %107 = vector.load %arg12[%c0_53, %c0_54] : memref<1x32xf32, #tpu.memory_space<vmem>>, vector<1x32xf32>
    %108 = vector.broadcast %107 : vector<1x32xf32> to vector<32x32xf32>
    %109 = arith.addf %106, %108 : vector<32x32xf32>
    %c0_55 = arith.constant 0 : index
    %c0_56 = arith.constant 0 : index
    %c0_57 = arith.constant 0 : index
    %110 = vector.load %arg13[%c0_55, %c0_56, %c0_57] : memref<1x32x32xf32, #tpu.memory_space<vmem>>, vector<1x32x32xf32>
    %111 = vector.shape_cast %110 : vector<1x32x32xf32> to vector<32x32xf32>
    %112 = vector.shape_cast %109 : vector<32x32xf32> to vector<1x32x32xf32>
    tpu.vector_store %arg13[%c0_55, %c0_56, %c0_57], %112 {strides = array<i32>} : memref<1x32x32xf32, #tpu.memory_space<vmem>>, vector<1x32x32xf32>,
    return
  }
  func.func @transform_0(%arg0: i32, %arg1: i32) -> (i32, i32, i32) {
    %c0_i32 = arith.constant 0 : i32
    %c0_i32_0 = arith.constant 0 : i32
    return %arg0, %arg1, %c0_i32 : i32, i32, i32
  }
  func.func @transform_1(%arg0: i32, %arg1: i32) -> (i32, i32, i32) {
    %c0_i32 = arith.constant 0 : i32
    %c0_i32_0 = arith.constant 0 : i32
    return %arg0, %arg1, %c0_i32 : i32, i32, i32
  }
  func.func @transform_2(%arg0: i32, %arg1: i32) -> (i32, i32, i32) {
    %c0_i32 = arith.constant 0 : i32
    %c0_i32_0 = arith.constant 0 : i32
    return %arg0, %arg1, %c0_i32 : i32, i32, i32
  }
  func.func @transform_3(%arg0: i32, %arg1: i32) -> (i32, i32) {
    %c0_i32 = arith.constant 0 : i32
    %c0_i32_0 = arith.constant 0 : i32
    %c0_i32_1 = arith.constant 0 : i32
    return %c0_i32, %c0_i32_0 : i32, i32
  }
  func.func @transform_4(%arg0: i32, %arg1: i32) -> (i32, i32) {
    %c0_i32 = arith.constant 0 : i32
    %c0_i32_0 = arith.constant 0 : i32
    %c0_i32_1 = arith.constant 0 : i32
    return %c0_i32, %c0_i32_0 : i32, i32
  }
  func.func @transform_5(%arg0: i32, %arg1: i32) -> (i32, i32) {
    %c0_i32 = arith.constant 0 : i32
    %c0_i32_0 = arith.constant 0 : i32
    %c0_i32_1 = arith.constant 0 : i32
    return %c0_i32, %c0_i32_0 : i32, i32
  }
  func.func @transform_6(%arg0: i32, %arg1: i32) -> (i32, i32) {
    %c0_i32 = arith.constant 0 : i32
    %c0_i32_0 = arith.constant 0 : i32
    %c0_i32_1 = arith.constant 0 : i32
    return %c0_i32, %c0_i32_0 : i32, i32
  }
  func.func @transform_7(%arg0: i32, %arg1: i32) -> (i32, i32) {
    %c0_i32 = arith.constant 0 : i32
    %c0_i32_0 = arith.constant 0 : i32
    %c0_i32_1 = arith.constant 0 : i32
    return %c0_i32, %c0_i32_0 : i32, i32
  }
  func.func @transform_8(%arg0: i32, %arg1: i32) -> (i32, i32) {
    %c0_i32 = arith.constant 0 : i32
    %c0_i32_0 = arith.constant 0 : i32
    %c0_i32_1 = arith.constant 0 : i32
    return %c0_i32, %c0_i32_0 : i32, i32
  }
  func.func @transform_9(%arg0: i32, %arg1: i32) -> (i32, i32) {
    %c0_i32 = arith.constant 0 : i32
    %c0_i32_0 = arith.constant 0 : i32
    %c0_i32_1 = arith.constant 0 : i32
    return %c0_i32, %c0_i32_0 : i32, i32
  }
  func.func @transform_10(%arg0: i32, %arg1: i32) -> (i32, i32) {
    %c0_i32 = arith.constant 0 : i32
    %c0_i32_0 = arith.constant 0 : i32
    %c0_i32_1 = arith.constant 0 : i32
    return %c0_i32, %c0_i32_0 : i32, i32
  }
  func.func @transform_11(%arg0: i32, %arg1: i32) -> (i32, i32, i32) {
    %c0_i32 = arith.constant 0 : i32
    %c0_i32_0 = arith.constant 0 : i32
    return %arg0, %arg1, %c0_i32 : i32, i32, i32
  }
}

</mosaic_0001>

<llo_original>
// kernel: tpu_custom_call.1
$region0: #{tpu_custom_call.1}
  #allocation0 [shape = 'u32[]', space=smem, size = 0x4, offset = 0x4, fixed_abs, tag = 'smem constant byte address 0x4 - core index']
  #allocation1 [shape = 'u32[72,128]{1,0:T(1,128)}', space=vmem, size = 0x9000, scoped, tag = 'internal scratch']
  #allocation2 [shape = 'f32[4,8,32]{2,1,0:T(8,128)}', space=vmem, size = 0x4000, scoped, tag = 'scratch operand']
  %s0 = inlined_call_operand.hbm [shape: f32[2,32,32], index: 0, kind: input, shape index: {}]
  %s1 = inlined_call_operand.hbm [shape: f32[2,32,32], index: 1, kind: input, shape index: {}]
  %s2 = inlined_call_operand.hbm [shape: f32[2,32,32], index: 2, kind: input, shape index: {}]
  %s3 = inlined_call_operand.hbm [shape: f32[32,32], index: 3, kind: input, shape index: {}]
  %s4 = inlined_call_operand.vmem [shape: f32[1,32], index: 4, kind: input, shape index: {}]
  %s5 = inlined_call_operand.hbm [shape: f32[32,32], index: 5, kind: input, shape index: {}]
  %s6 = inlined_call_operand.vmem [shape: f32[1,32], index: 6, kind: input, shape index: {}]
  %s7 = inlined_call_operand.hbm [shape: f32[32,32], index: 7, kind: input, shape index: {}]
  %s8 = inlined_call_operand.vmem [shape: f32[1,32], index: 8, kind: input, shape index: {}]
  %s9 = inlined_call_operand.hbm [shape: f32[32,32], index: 9, kind: input, shape index: {}]
  %s10 = inlined_call_operand.vmem [shape: f32[1,32], index: 10, kind: input, shape index: {}]
  %s11 = inlined_call_operand.hbm [shape: f32[2,32,32], index: 11, kind: output, shape index: {}]
  %s12 = sld [smem:[#allocation0]]
  $region105: #{tpu_custom_call.1} parent=0
    _
  %s14 = ssub.s32 1, %s12
  %s15 = scalar_select 0, %s14, %s12
  $region1: #{tpu_custom_call.1} parent=0
    #allocation3 [shape = 'u8[32768]{0}', space=vmem, size = 0x8000, scoped, tag = 'input window, operand 0']
    #allocation4 [shape = 's32[2]{0}', space=sflag, size = 0x8, scoped, tag = 'scoped memory for tpu_custom_call.1']
    #allocation5 [shape = 's32[2]{0}', space=sflag, size = 0x8, scoped, tag = 'scoped memory for tpu_custom_call.1']
    #allocation6 [shape = 'u8[32768]{0}', space=vmem, size = 0x8000, scoped, tag = 'input window, operand 1']
    #allocation7 [shape = 's32[2]{0}', space=sflag, size = 0x8, scoped, tag = 'scoped memory for tpu_custom_call.1']
    #allocation8 [shape = 'u8[32768]{0}', space=vmem, size = 0x8000, scoped, tag = 'input window, operand 2']
    #allocation9 [shape = 'u8[16384]{0}', space=vmem, size = 0x4000, scoped, tag = 'input window, operand 3, single buffered']
    #allocation10 [shape = 's32[1]{0}', space=sflag, size = 0x4, scoped, tag = 'scoped memory for tpu_custom_call.1']
    #allocation11 [shape = 'u8[16384]{0}', space=vmem, size = 0x4000, scoped, tag = 'input window, operand 5, single buffered']
    #allocation12 [shape = 'u8[16384]{0}', space=vmem, size = 0x4000, scoped, tag = 'input window, operand 7, single buffered']
    #allocation13 [shape = 's32[1]{0}', space=sflag, size = 0x4, scoped, tag = 'scoped memory for tpu_custom_call.1']
    #allocation14 [shape = 'u8[16384]{0}', space=vmem, size = 0x4000, scoped, tag = 'input window, operand 9, single buffered']
    #allocation15 [shape = 'u8[32768]{0}', space=vmem, size = 0x8000, scoped, tag = 'output window, operand 0']
    %16 = vsyncpa [#allocation4], 0
    %s17 = scalar_lea.sflag [#allocation4], 1
    %18 = vsyncpa %s17, 0
    %19 = vsyncpa [#allocation7], 0
    %s20 = scalar_lea.sflag [#allocation7], 1
    %21 = vsyncpa %s20, 0
    %22 = vsyncpa [#allocation10], 0
    %23 = vsyncpa [#allocation13], 0
    %24 = vsyncpa [#allocation5], 0
    %s25 = scalar_lea.sflag [#allocation5], 1
    %26 = vsyncpa %s25, 0
    loop: start=0, step=1, limit=4
    $region2: #{tpu_custom_call.1} parent=1 // loop_pre_header
      _
    $region3: #{tpu_custom_call.1} parent=1 // loop_header
      %s28 = sphi 0, %s32
      %p29 = scmp.ge.s32.totalorder %s28, 4
      %s35 = sphi 0, %s47
      %s36 = sphi 0, %s43
      %s37 = sphi 0, %s35
      %s38 = sphi 0, %s36
      %s39 = sphi 0, %s37
      %s40 = sphi 0, %s38
      %s52 = sphi 0, %s54
      %s55 = sphi 0, %s52
      %s56 = sphi 0, %s55
      %s72 = sphi 0, %s56
      %s80 = sphi 0, %s82
      %s83 = sphi 0, %s80
      %s84 = sphi 0, %s83
      %s100 = sphi 0, %s84
      %s108 = sphi 0, %s110
      %s111 = sphi 0, %s108
      %s112 = sphi 0, %s111
      %s128 = sphi 0, %s112
      %s132 = sphi 0, %s132
      %s134 = sphi 0, %s132
      %s135 = sphi 0, %s134
      %s149 = sphi 0, %s135
      %s153 = sphi 0, %s153
      %s155 = sphi 0, %s153
      %s156 = sphi 0, %s155
      %s170 = sphi 0, %s156
      %s174 = sphi 0, %s174
      %s176 = sphi 0, %s174
      %s177 = sphi 0, %s176
      %s191 = sphi 0, %s177
      %s195 = sphi 0, %s195
      %s197 = sphi 0, %s195
      %s198 = sphi 0, %s197
      %s212 = sphi 0, %s198
      %s216 = sphi 0, %s216
      %s218 = sphi 0, %s216
      %s219 = sphi 0, %s218
      %s233 = sphi 0, %s219
      %s237 = sphi 0, %s237
      %s239 = sphi 0, %s237
      %s240 = sphi 0, %s239
      %s254 = sphi 0, %s240
      %s258 = sphi 0, %s258
      %s260 = sphi 0, %s258
      %s261 = sphi 0, %s260
      %s275 = sphi 0, %s261
      %s279 = sphi 0, %s279
      %s281 = sphi 0, %s279
      %s282 = sphi 0, %s281
      %s296 = sphi 0, %s282
      %s304 = sphi 0, %s306
      %s307 = sphi 0, %s304
      %s308 = sphi 0, %s307
      %s324 = sphi 0, %s308
    $region4: #{tpu_custom_call.1} parent=1 // loop_header_branch
      %31 = sbr.rel (%p29) target = $region8
    $region5: #{tpu_custom_call.1} parent=1 // loop_body
      %s33 = ssub.s32 %s28, 1
      %s34 = ssub.s32 %s28, 2
      %s41 = sadd.s32 1, %s36
      %p42 = scmp.ge.s32.totalorder %s41, 1
      %s43 = scalar_select %p42, 0, %s41
      %s44 = sadd.s32 1, %s35
      %s45 = scalar_select %p42, %s44, %s35
      %p46 = scmp.ge.s32.totalorder %s45, 2
      %s47 = scalar_select %p46, 0, %s45
      %s48 = ssub.s32 %s35, %s47
      %s49 = ssub.s32 %s36, %s43
      %s50 = sor.u32 %s48, %s49
      %p51 = scmp.eq.s32.totalorder %s50, 0
      %s53 = sadd.s32 %s52, 1
      %s54 = scalar_select %p51, %s52, %s53
      %p57 = pneg %p51
      %p58 = scmp.eq.s32.totalorder %s28, 1
      %p59 = por %p57, %p58
      %p60 = scmp.ne.s32.totalorder %s52, %s55
      %p61 = scmp.eq.s32.totalorder %s28, 0
      %p62 = por %p60, %p61
      %p63 = scmp.ne.s32.totalorder %s52, %s55
      %p64 = scmp.eq.s32.totalorder %s33, 1
      %p65 = por %p63, %p64
      %p66 = scmp.ne.s32.totalorder %s55, %s56
      %p67 = scmp.eq.s32.totalorder %s33, 0
      %p68 = por %p66, %p67
      %p69 = scmp.ne.s32.totalorder %s55, %s56
      %p70 = scmp.eq.s32.totalorder %s34, 1
      %p71 = por %p69, %p70
      %p73 = scmp.ne.s32.totalorder %s56, %s72
      %p74 = scmp.eq.s32.totalorder %s34, 0
      %p75 = por %p73, %p74
      %s76 = ssub.s32 %s35, %s47
      %s77 = ssub.s32 %s36, %s43
      %s78 = sor.u32 %s76, %s77
      %p79 = scmp.eq.s32.totalorder %s78, 0
      %s81 = sadd.s32 %s80, 1
      %s82 = scalar_select %p79, %s80, %s81
      %p85 = pneg %p79
      %p86 = scmp.eq.s32.totalorder %s28, 1
      %p87 = por %p85, %p86
      %p88 = scmp.ne.s32.totalorder %s80, %s83
      %p89 = scmp.eq.s32.totalorder %s28, 0
      %p90 = por %p88, %p89
      %p91 = scmp.ne.s32.totalorder %s80, %s83
      %p92 = scmp.eq.s32.totalorder %s33, 1
      %p93 = por %p91, %p92
      %p94 = scmp.ne.s32.totalorder %s83, %s84
      %p95 = scmp.eq.s32.totalorder %s33, 0
      %p96 = por %p94, %p95
      %p97 = scmp.ne.s32.totalorder %s83, %s84
      %p98 = scmp.eq.s32.totalorder %s34, 1
      %p99 = por %p97, %p98
      %p101 = scmp.ne.s32.totalorder %s84, %s100
      %p102 = scmp.eq.s32.totalorder %s34, 0
      %p103 = por %p101, %p102
      %s104 = ssub.s32 %s35, %s47
      %s105 = ssub.s32 %s36, %s43
      %s106 = sor.u32 %s104, %s105
      %p107 = scmp.eq.s32.totalorder %s106, 0
      %s109 = sadd.s32 %s108, 1
      %s110 = scalar_select %p107, %s108, %s109
      %p113 = pneg %p107
      %p114 = scmp.eq.s32.totalorder %s28, 1
      %p115 = por %p113, %p114
      %p116 = scmp.ne.s32.totalorder %s108, %s111
      %p117 = scmp.eq.s32.totalorder %s28, 0
      %p118 = por %p116, %p117
      %p119 = scmp.ne.s32.totalorder %s108, %s111
      %p120 = scmp.eq.s32.totalorder %s33, 1
      %p121 = por %p119, %p120
      %p122 = scmp.ne.s32.totalorder %s111, %s112
      %p123 = scmp.eq.s32.totalorder %s33, 0
      %p124 = por %p122, %p123
      %p125 = scmp.ne.s32.totalorder %s111, %s112
      %p126 = scmp.eq.s32.totalorder %s34, 1
      %p127 = por %p125, %p126
      %p129 = scmp.ne.s32.totalorder %s112, %s128
      %p130 = scmp.eq.s32.totalorder %s34, 0
      %p131 = por %p129, %p130
      %s133 = sadd.s32 %s132, 1
      %p136 = scmp.eq.s32.totalorder %s28, 1
      %p137 = scmp.ne.s32.totalorder %s132, %s134
      %p138 = scmp.eq.s32.totalorder %s28, 0
      %p139 = por %p137, %p138
      %p140 = scmp.ne.s32.totalorder %s132, %s134
      %p141 = scmp.eq.s32.totalorder %s33, 1
      %p142 = por %p140, %p141
      %p143 = scmp.ne.s32.totalorder %s134, %s135
      %p144 = scmp.eq.s32.totalorder %s33, 0
      %p145 = por %p143, %p144
      %p146 = scmp.ne.s32.totalorder %s134, %s135
      %p147 = scmp.eq.s32.totalorder %s34, 1
      %p148 = por %p146, %p147
      %p150 = scmp.ne.s32.totalorder %s135, %s149
      %p151 = scmp.eq.s32.totalorder %s34, 0
      %p152 = por %p150, %p151
      %s154 = sadd.s32 %s153, 1
      %p157 = scmp.eq.s32.totalorder %s28, 1
      %p158 = scmp.ne.s32.totalorder %s153, %s155
      %p159 = scmp.eq.s32.totalorder %s28, 0
      %p160 = por %p158, %p159
      %p161 = scmp.ne.s32.totalorder %s153, %s155
      %p162 = scmp.eq.s32.totalorder %s33, 1
      %p163 = por %p161, %p162
      %p164 = scmp.ne.s32.totalorder %s155, %s156
      %p165 = scmp.eq.s32.totalorder %s33, 0
      %p166 = por %p164, %p165
      %p167 = scmp.ne.s32.totalorder %s155, %s156
      %p168 = scmp.eq.s32.totalorder %s34, 1
      %p169 = por %p167, %p168
      %p171 = scmp.ne.s32.totalorder %s156, %s170
      %p172 = scmp.eq.s32.totalorder %s34, 0
      %p173 = por %p171, %p172
      %s175 = sadd.s32 %s174, 1
      %p178 = scmp.eq.s32.totalorder %s28, 1
      %p179 = scmp.ne.s32.totalorder %s174, %s176
      %p180 = scmp.eq.s32.totalorder %s28, 0
      %p181 = por %p179, %p180
      %p182 = scmp.ne.s32.totalorder %s174, %s176
      %p183 = scmp.eq.s32.totalorder %s33, 1
      %p184 = por %p182, %p183
      %p185 = scmp.ne.s32.totalorder %s176, %s177
      %p186 = scmp.eq.s32.totalorder %s33, 0
      %p187 = por %p185, %p186
      %p188 = scmp.ne.s32.totalorder %s176, %s177
      %p189 = scmp.eq.s32.totalorder %s34, 1
      %p190 = por %p188, %p189
      %p192 = scmp.ne.s32.totalorder %s177, %s191
      %p193 = scmp.eq.s32.totalorder %s34, 0
      %p194 = por %p192, %p193
      %s196 = sadd.s32 %s195, 1
      %p199 = scmp.eq.s32.totalorder %s28, 1
      %p200 = scmp.ne.s32.totalorder %s195, %s197
      %p201 = scmp.eq.s32.totalorder %s28, 0
      %p202 = por %p200, %p201
      %p203 = scmp.ne.s32.totalorder %s195, %s197
      %p204 = scmp.eq.s32.totalorder %s33, 1
      %p205 = por %p203, %p204
      %p206 = scmp.ne.s32.totalorder %s197, %s198
      %p207 = scmp.eq.s32.totalorder %s33, 0
      %p208 = por %p206, %p207
      %p209 = scmp.ne.s32.totalorder %s197, %s198
      %p210 = scmp.eq.s32.totalorder %s34, 1
      %p211 = por %p209, %p210
      %p213 = scmp.ne.s32.totalorder %s198, %s212
      %p214 = scmp.eq.s32.totalorder %s34, 0
      %p215 = por %p213, %p214
      %s217 = sadd.s32 %s216, 1
      %p220 = scmp.eq.s32.totalorder %s28, 1
      %p221 = scmp.ne.s32.totalorder %s216, %s218
      %p222 = scmp.eq.s32.totalorder %s28, 0
      %p223 = por %p221, %p222
      %p224 = scmp.ne.s32.totalorder %s216, %s218
      %p225 = scmp.eq.s32.totalorder %s33, 1
      %p226 = por %p224, %p225
      %p227 = scmp.ne.s32.totalorder %s218, %s219
      %p228 = scmp.eq.s32.totalorder %s33, 0
      %p229 = por %p227, %p228
      %p230 = scmp.ne.s32.totalorder %s218, %s219
      %p231 = scmp.eq.s32.totalorder %s34, 1
      %p232 = por %p230, %p231
      %p234 = scmp.ne.s32.totalorder %s219, %s233
      %p235 = scmp.eq.s32.totalorder %s34, 0
      %p236 = por %p234, %p235
      %s238 = sadd.s32 %s237, 1
      %p241 = scmp.eq.s32.totalorder %s28, 1
      %p242 = scmp.ne.s32.totalorder %s237, %s239
      %p243 = scmp.eq.s32.totalorder %s28, 0
      %p244 = por %p242, %p243
      %p245 = scmp.ne.s32.totalorder %s237, %s239
      %p246 = scmp.eq.s32.totalorder %s33, 1
      %p247 = por %p245, %p246
      %p248 = scmp.ne.s32.totalorder %s239, %s240
      %p249 = scmp.eq.s32.totalorder %s33, 0
      %p250 = por %p248, %p249
      %p251 = scmp.ne.s32.totalorder %s239, %s240
      %p252 = scmp.eq.s32.totalorder %s34, 1
      %p253 = por %p251, %p252
      %p255 = scmp.ne.s32.totalorder %s240, %s254
      %p256 = scmp.eq.s32.totalorder %s34, 0
      %p257 = por %p255, %p256
      %s259 = sadd.s32 %s258, 1
      %p262 = scmp.eq.s32.totalorder %s28, 1
      %p263 = scmp.ne.s32.totalorder %s258, %s260
      %p264 = scmp.eq.s32.totalorder %s28, 0
      %p265 = por %p263, %p264
      %p266 = scmp.ne.s32.totalorder %s258, %s260
      %p267 = scmp.eq.s32.totalorder %s33, 1
      %p268 = por %p266, %p267
      %p269 = scmp.ne.s32.totalorder %s260, %s261
      %p270 = scmp.eq.s32.totalorder %s33, 0
      %p271 = por %p269, %p270
      %p272 = scmp.ne.s32.totalorder %s260, %s261
      %p273 = scmp.eq.s32.totalorder %s34, 1
      %p274 = por %p272, %p273
      %p276 = scmp.ne.s32.totalorder %s261, %s275
      %p277 = scmp.eq.s32.totalorder %s34, 0
      %p278 = por %p276, %p277
      %s280 = sadd.s32 %s279, 1
      %p283 = scmp.eq.s32.totalorder %s28, 1
      %p284 = scmp.ne.s32.totalorder %s279, %s281
      %p285 = scmp.eq.s32.totalorder %s28, 0
      %p286 = por %p284, %p285
      %p287 = scmp.ne.s32.totalorder %s279, %s281
      %p288 = scmp.eq.s32.totalorder %s33, 1
      %p289 = por %p287, %p288
      %p290 = scmp.ne.s32.totalorder %s281, %s282
      %p291 = scmp.eq.s32.totalorder %s33, 0
      %p292 = por %p290, %p291
      %p293 = scmp.ne.s32.totalorder %s281, %s282
      %p294 = scmp.eq.s32.totalorder %s34, 1
      %p295 = por %p293, %p294
      %p297 = scmp.ne.s32.totalorder %s282, %s296
      %p298 = scmp.eq.s32.totalorder %s34, 0
      %p299 = por %p297, %p298
      %s300 = ssub.s32 %s35, %s47
      %s301 = ssub.s32 %s36, %s43
      %s302 = sor.u32 %s300, %s301
      %p303 = scmp.eq.s32.totalorder %s302, 0
      %s305 = sadd.s32 %s304, 1
      %s306 = scalar_select %p303, %s304, %s305
      %p309 = pneg %p303
      %p310 = scmp.eq.s32.totalorder %s28, 1
      %p311 = por %p309, %p310
      %p312 = scmp.ne.s32.totalorder %s304, %s307
      %p313 = scmp.eq.s32.totalorder %s28, 0
      %p314 = por %p312, %p313
      %p315 = scmp.ne.s32.totalorder %s304, %s307
      %p316 = scmp.eq.s32.totalorder %s33, 1
      %p317 = por %p315, %p316
      %p318 = scmp.ne.s32.totalorder %s307, %s308
      %p319 = scmp.eq.s32.totalorder %s33, 0
      %p320 = por %p318, %p319
      %p321 = scmp.ne.s32.totalorder %s307, %s308
      %p322 = scmp.eq.s32.totalorder %s34, 1
      %p323 = por %p321, %p322
      %p325 = scmp.ne.s32.totalorder %s308, %s324
      %p326 = scmp.eq.s32.totalorder %s34, 0
      %p327 = por %p325, %p326
      %p328 = scmp.le.s32.totalorder 1, %s28
      %p329 = scmp.lt.s32.totalorder %s28, 3
      %p330 = pnand %p328, %p329
      %p331 = pneg %p330
      // Predicated region
      $region9: #{tpu_custom_call.1} parent=5 // pred_check
        _
      $region10: #{tpu_custom_call.1} parent=5 // pred_check_branch
        %333 = sbr.rel (%p330) target = $region12
      $region11: #{tpu_custom_call.1} parent=5 // pred_region
        %s334 = ssub.s32 %s28, 1
        // Predicated region
        $region13: #{tpu_custom_call.1} parent=11 // pred_check
          %p335 = pneg %p145
        $region14: #{tpu_custom_call.1} parent=11 // pred_check_branch
          %337 = sbr.rel (%p335) target = $region16
        $region15: #{tpu_custom_call.1} parent=11 // pred_region
          %339 = vsyncadd [#allocation10], 0
          %s340 = sshll.u32 %s3, 4
          %s341 = int_to_ptr.hbm [resolvable:$true] %s340
          %s342 = sshll.u32 [#allocation9], 4
          %s343 = int_to_ptr.vmem [resolvable:$true] %s342
          %348 = dma.hbm_to_vmem [thread:$0]  %s341, 512, %s343, [#allocation10], 128, 128, 8
        $region16: #{tpu_custom_call.1} parent=11 // pred_fallthru
          _
        // Predicated region
        $region17: #{tpu_custom_call.1} parent=11 // pred_check
          %p349 = pneg %p166
        $region18: #{tpu_custom_call.1} parent=11 // pred_check_branch
          %351 = sbr.rel (%p349) target = $region20
        $region19: #{tpu_custom_call.1} parent=11 // pred_region
          _
        $region20: #{tpu_custom_call.1} parent=11 // pred_fallthru
          _
        // Predicated region
        $region21: #{tpu_custom_call.1} parent=11 // pred_check
          %p352 = pneg %p187
        $region22: #{tpu_custom_call.1} parent=11 // pred_check_branch
          %354 = sbr.rel (%p352) target = $region24
        $region23: #{tpu_custom_call.1} parent=11 // pred_region
          %356 = vsyncadd [#allocation10], 0
          %s357 = sshll.u32 %s5, 4
          %s358 = int_to_ptr.hbm [resolvable:$true] %s357
          %s359 = sshll.u32 [#allocation11], 4
          %s360 = int_to_ptr.vmem [resolvable:$true] %s359
          %365 = dma.hbm_to_vmem [thread:$0]  %s358, 512, %s360, [#allocation10], 128, 128, 8
        $region24: #{tpu_custom_call.1} parent=11 // pred_fallthru
          _
        // Predicated region
        $region25: #{tpu_custom_call.1} parent=11 // pred_check
          %p366 = pneg %p208
        $region26: #{tpu_custom_call.1} parent=11 // pred_check_branch
          %368 = sbr.rel (%p366) target = $region28
        $region27: #{tpu_custom_call.1} parent=11 // pred_region
          _
        $region28: #{tpu_custom_call.1} parent=11 // pred_fallthru
          _
        // Predicated region
        $region29: #{tpu_custom_call.1} parent=11 // pred_check
          %p369 = pneg %p229
        $region30: #{tpu_custom_call.1} parent=11 // pred_check_branch
          %371 = sbr.rel (%p369) target = $region32
        $region31: #{tpu_custom_call.1} parent=11 // pred_region
          %373 = vsyncadd [#allocation13], 0
          %s374 = sshll.u32 %s7, 4
          %s375 = int_to_ptr.hbm [resolvable:$true] %s374
          %s376 = sshll.u32 [#allocation12], 4
          %s377 = int_to_ptr.vmem [resolvable:$true] %s376
          %382 = dma.hbm_to_vmem [thread:$0]  %s375, 512, %s377, [#allocation13], 128, 128, 8
        $region32: #{tpu_custom_call.1} parent=11 // pred_fallthru
          _
        // Predicated region
        $region33: #{tpu_custom_call.1} parent=11 // pred_check
          %p383 = pneg %p250
        $region34: #{tpu_custom_call.1} parent=11 // pred_check_branch
          %385 = sbr.rel (%p383) target = $region36
        $region35: #{tpu_custom_call.1} parent=11 // pred_region
          _
        $region36: #{tpu_custom_call.1} parent=11 // pred_fallthru
          _
        // Predicated region
        $region37: #{tpu_custom_call.1} parent=11 // pred_check
          %p386 = pneg %p271
        $region38: #{tpu_custom_call.1} parent=11 // pred_check_branch
          %388 = sbr.rel (%p386) target = $region40
        $region39: #{tpu_custom_call.1} parent=11 // pred_region
          %390 = vsyncadd [#allocation13], 0
          %s391 = sshll.u32 %s9, 4
          %s392 = int_to_ptr.hbm [resolvable:$true] %s391
          %s393 = sshll.u32 [#allocation14], 4
          %s394 = int_to_ptr.vmem [resolvable:$true] %s393
          %399 = dma.hbm_to_vmem [thread:$0]  %s392, 512, %s394, [#allocation13], 128, 128, 8
        $region40: #{tpu_custom_call.1} parent=11 // pred_fallthru
          _
        // Predicated region
        $region41: #{tpu_custom_call.1} parent=11 // pred_check
          %p400 = pneg %p292
        $region42: #{tpu_custom_call.1} parent=11 // pred_check_branch
          %402 = sbr.rel (%p400) target = $region44
        $region43: #{tpu_custom_call.1} parent=11 // pred_region
          _
        $region44: #{tpu_custom_call.1} parent=11 // pred_fallthru
          _
      $region12: #{tpu_custom_call.1} parent=5 // pred_fallthru
        _
      %p403 = scmp.lt.s32.totalorder %s28, 2
      // Predicated region
      $region45: #{tpu_custom_call.1} parent=5 // pred_check
        %p404 = pneg %p403
      $region46: #{tpu_custom_call.1} parent=5 // pred_check_branch
        %406 = sbr.rel (%p404) target = $region48
      $region47: #{tpu_custom_call.1} parent=5 // pred_region
        // Predicated region
        $region49: #{tpu_custom_call.1} parent=47 // pred_check
          %p407 = pneg %p62
        $region50: #{tpu_custom_call.1} parent=47 // pred_check_branch
          %409 = sbr.rel (%p407) target = $region52
        $region51: #{tpu_custom_call.1} parent=47 // pred_region
          %s410 = sand.u32 %s52, 1
          %s411 = scalar_lea.sflag [#allocation4], %s410
          %s412 = sand.u32 %s52, 1
          %s413 = smul.addr %s412, 32
          %s414 = scalar_lea.vmem [#allocation3], %s413
          %s415 = smul.u32 4, %s36
          %417 = vsyncadd %s411, 0
          %s418 = smul.addr %s35, 4
          %s419 = sadd.s32 %s415, %s418
          %s420 = smul.addr %s419, 8
          %s421 = scalar_lea.hbm %s0, %s420
          %s422 = sshll.u32 %s421, 4
          %s423 = int_to_ptr.hbm [resolvable:$true] %s422
          %s424 = sshll.u32 %s414, 4
          %s425 = int_to_ptr.vmem [resolvable:$true] %s424
          %430 = dma.hbm_to_vmem [thread:$0]  %s423, 512, %s425, %s411, 128, 128, 8
        $region52: #{tpu_custom_call.1} parent=47 // pred_fallthru
          _
        // Predicated region
        $region53: #{tpu_custom_call.1} parent=47 // pred_check
          %p431 = pneg %p90
        $region54: #{tpu_custom_call.1} parent=47 // pred_check_branch
          %433 = sbr.rel (%p431) target = $region56
        $region55: #{tpu_custom_call.1} parent=47 // pred_region
          %s434 = sand.u32 %s28, 1
          %s435 = scalar_lea.sflag [#allocation7], %s434
          %s436 = sand.u32 %s80, 1
          %s437 = smul.addr %s436, 32
          %s438 = scalar_lea.vmem [#allocation6], %s437
          %s439 = smul.u32 4, %s36
          %441 = vsyncadd %s435, 0
          %s442 = smul.addr %s35, 4
          %s443 = sadd.s32 %s439, %s442
          %s444 = smul.addr %s443, 8
          %s445 = scalar_lea.hbm %s1, %s444
          %s446 = sshll.u32 %s445, 4
          %s447 = int_to_ptr.hbm [resolvable:$true] %s446
          %s448 = sshll.u32 %s438, 4
          %s449 = int_to_ptr.vmem [resolvable:$true] %s448
          %454 = dma.hbm_to_vmem [thread:$0]  %s447, 512, %s449, %s435, 128, 128, 8
        $region56: #{tpu_custom_call.1} parent=47 // pred_fallthru
          _
        // Predicated region
        $region57: #{tpu_custom_call.1} parent=47 // pred_check
          %p455 = pneg %p118
        $region58: #{tpu_custom_call.1} parent=47 // pred_check_branch
          %457 = sbr.rel (%p455) target = $region60
        $region59: #{tpu_custom_call.1} parent=47 // pred_region
          %s458 = sand.u32 %s28, 1
          %s459 = scalar_lea.sflag [#allocation7], %s458
          %s460 = sand.u32 %s108, 1
          %s461 = smul.addr %s460, 32
          %s462 = scalar_lea.vmem [#allocation8], %s461
          %s463 = smul.u32 4, %s36
          %465 = vsyncadd %s459, 0
          %s466 = smul.addr %s35, 4
          %s467 = sadd.s32 %s463, %s466
          %s468 = smul.addr %s467, 8
          %s469 = scalar_lea.hbm %s2, %s468
          %s470 = sshll.u32 %s469, 4
          %s471 = int_to_ptr.hbm [resolvable:$true] %s470
          %s472 = sshll.u32 %s462, 4
          %s473 = int_to_ptr.vmem [resolvable:$true] %s472
          %478 = dma.hbm_to_vmem [thread:$0]  %s471, 512, %s473, %s459, 128, 128, 8
        $region60: #{tpu_custom_call.1} parent=47 // pred_fallthru
          _
      $region48: #{tpu_custom_call.1} parent=5 // pred_fallthru
        _
      %p479 = scmp.le.s32.totalorder 1, %s28
      %p480 = scmp.lt.s32.totalorder %s28, 3
      %p481 = pnand %p479, %p480
      %p482 = pneg %p481
      // Predicated region
      $region61: #{tpu_custom_call.1} parent=5 // pred_check
        _
      $region62: #{tpu_custom_call.1} parent=5 // pred_check_branch
        %484 = sbr.rel (%p481) target = $region64
      $region63: #{tpu_custom_call.1} parent=5 // pred_region
        %s485 = ssub.s32 %s28, 1
        %s486 = sand.u32 %s55, 1
        %s487 = scalar_lea.sflag [#allocation4], %s486
        %s488 = sand.u32 %s55, 1
        %s489 = smul.addr %s488, 32
        %s490 = scalar_lea.vmem [#allocation3], %s489
        // Predicated region
        $region65: #{tpu_custom_call.1} parent=63 // pred_check
          %p491 = pneg %p68
        $region66: #{tpu_custom_call.1} parent=63 // pred_check_branch
          %493 = sbr.rel (%p491) target = $region68
        $region67: #{tpu_custom_call.1} parent=63 // pred_region
          %495 = dma.done %s487, 512
        $region68: #{tpu_custom_call.1} parent=63 // pred_fallthru
          _
        %s496 = sand.u32 %s33, 1
        %s497 = scalar_lea.sflag [#allocation7], %s496
        %s498 = sand.u32 %s83, 1
        %s499 = smul.addr %s498, 32
        %s500 = scalar_lea.vmem [#allocation6], %s499
        // Predicated region
        $region69: #{tpu_custom_call.1} parent=63 // pred_check
          %p501 = pneg %p96
        $region70: #{tpu_custom_call.1} parent=63 // pred_check_branch
          %503 = sbr.rel (%p501) target = $region72
        $region71: #{tpu_custom_call.1} parent=63 // pred_region
          %505 = dma.done %s497, 512
        $region72: #{tpu_custom_call.1} parent=63 // pred_fallthru
          _
        %s506 = sand.u32 %s33, 1
        %s507 = scalar_lea.sflag [#allocation7], %s506
        %s508 = sand.u32 %s111, 1
        %s509 = smul.addr %s508, 32
        %s510 = scalar_lea.vmem [#allocation8], %s509
        // Predicated region
        $region73: #{tpu_custom_call.1} parent=63 // pred_check
          %p511 = pneg %p124
        $region74: #{tpu_custom_call.1} parent=63 // pred_check_branch
          %513 = sbr.rel (%p511) target = $region76
        $region75: #{tpu_custom_call.1} parent=63 // pred_region
          %515 = dma.done %s507, 512
        $region76: #{tpu_custom_call.1} parent=63 // pred_fallthru
          _
        // Predicated region
        $region77: #{tpu_custom_call.1} parent=63 // pred_check
          %p516 = pneg %p145
        $region78: #{tpu_custom_call.1} parent=63 // pred_check_branch
          %518 = sbr.rel (%p516) target = $region80
        $region79: #{tpu_custom_call.1} parent=63 // pred_region
          %520 = dma.done [#allocation10], 512
        $region80: #{tpu_custom_call.1} parent=63 // pred_fallthru
          _
        // Predicated region
        $region81: #{tpu_custom_call.1} parent=63 // pred_check
          %p521 = pneg %p187
        $region82: #{tpu_custom_call.1} parent=63 // pred_check_branch
          %523 = sbr.rel (%p521) target = $region84
        $region83: #{tpu_custom_call.1} parent=63 // pred_region
          %525 = dma.done [#allocation10], 512
        $region84: #{tpu_custom_call.1} parent=63 // pred_fallthru
          _
        // Predicated region
        $region85: #{tpu_custom_call.1} parent=63 // pred_check
          %p526 = pneg %p229
        $region86: #{tpu_custom_call.1} parent=63 // pred_check_branch
          %528 = sbr.rel (%p526) target = $region88
        $region87: #{tpu_custom_call.1} parent=63 // pred_region
          %530 = dma.done [#allocation13], 512
        $region88: #{tpu_custom_call.1} parent=63 // pred_fallthru
          _
        // Predicated region
        $region89: #{tpu_custom_call.1} parent=63 // pred_check
          %p531 = pneg %p271
        $region90: #{tpu_custom_call.1} parent=63 // pred_check_branch
          %533 = sbr.rel (%p531) target = $region92
        $region91: #{tpu_custom_call.1} parent=63 // pred_region
          %535 = dma.done [#allocation13], 512
        $region92: #{tpu_custom_call.1} parent=63 // pred_fallthru
          _
        %s536 = sand.u32 %s55, 1
        %s537 = scalar_lea.sflag [#allocation4], %s536
        %s538 = sand.u32 %s55, 1
        %s539 = smul.addr %s538, 32
        %s540 = scalar_lea.vmem [#allocation3], %s539
        %p541 = pneg %p68
        %p542 = pneg %p65
        %s543 = sand.u32 %s33, 1
        %s544 = scalar_lea.sflag [#allocation7], %s543
        %s545 = sand.u32 %s83, 1
        %s546 = smul.addr %s545, 32
        %s547 = scalar_lea.vmem [#allocation6], %s546
        %p548 = pneg %p96
        %p549 = pneg %p93
        %s550 = sand.u32 %s33, 1
        %s551 = scalar_lea.sflag [#allocation7], %s550
        %s552 = sand.u32 %s111, 1
        %s553 = smul.addr %s552, 32
        %s554 = scalar_lea.vmem [#allocation8], %s553
        %p555 = pneg %p124
        %p556 = pneg %p121
        %p557 = pneg %p145
        %p558 = pneg %p142
        %p559 = pneg %p166
        %p560 = pneg %p163
        %p561 = pneg %p187
        %p562 = pneg %p184
        %p563 = pneg %p208
        %p564 = pneg %p205
        %p565 = pneg %p229
        %p566 = pneg %p226
        %p567 = pneg %p250
        %p568 = pneg %p247
        %p569 = pneg %p271
        %p570 = pneg %p268
        %p571 = pneg %p292
        %p572 = pneg %p289
        %p573 = pneg %p320
        %p574 = pneg %p317
        %s575 = sand.u32 %s307, 1
        %s576 = scalar_lea.sflag [#allocation5], %s575
        %s577 = sand.u32 %s307, 1
        %s578 = smul.addr %s577, 32
        %s579 = scalar_lea.vmem [#allocation15], %s578
        %s580 = smul.u32 4, %s38
        %s581 = smul.u32 4, %s38
        %s582 = smul.u32 4, %s38
        %s583 = smul.u32 4, %s38
        %v585 = vld [vmem:[%s490] sm:$0xff]
        %v586 = vld [vmem:[%s490 + $0x8] sm:$0xff]
        %v587 = vld [vmem:[%s490 + $0x10] sm:$0xff]
        %v588 = vld [vmem:[%s490 + $0x18] sm:$0xff]
        %v589 = vld [vmem:[%s500] sm:$0xff]
        %v590 = vld [vmem:[%s500 + $0x8] sm:$0xff]
        %v591 = vld [vmem:[%s500 + $0x10] sm:$0xff]
        %v592 = vld [vmem:[%s500 + $0x18] sm:$0xff]
        %v593 = vld [vmem:[%s510] sm:$0xff]
        %v594 = vld [vmem:[%s510 + $0x8] sm:$0xff]
        %v595 = vld [vmem:[%s510 + $0x10] sm:$0xff]
        %v596 = vld [vmem:[%s510 + $0x18] sm:$0xff]
        %v597 = vpack.c.bf16 %v586, %v585
        %v598 = vpack.c.bf16 %v588, %v587
        %v599 = vld [vmem:[#allocation9] sm:$0xff]
        %v600 = vld [vmem:[#allocation9 + $0x8] sm:$0xff]
        %v601 = vld [vmem:[#allocation9 + $0x10] sm:$0xff]
        %v602 = vld [vmem:[#allocation9 + $0x18] sm:$0xff]
        %v603 = vpack.c.bf16 %v600, %v599
        %v604 = vpack.c.bf16 %v602, %v601
        %v605 = vld [vmem:[%s4] sm:$0x1]
        %v607 = vperm.slane %v605, 0
        %vm609 = vcmask 261120
        %v611 = vsel %vm609, %v597, 0
        %v614 = vsel %vm609, %v598, 0
        %616 = vmatpush.bf16.msra.mxu0 0
        %617 = vmatpush.bf16.msra.mxu0 0
        %618 = vmatpush.bf16.msra.mxu0 0
        %619 = vmatpush.bf16.msra.mxu0 0
        %620 = vmatpush.bf16.msra.mxu0 0
        %621 = vmatpush.bf16.msra.mxu0 0
        %622 = vmatpush.bf16.msra.mxu0 %v604
        %623 = vmatpush.bf16.msra.mxu0 %v603
        %624 = vmatmul.bf16.gmra.mxu0 %v611
        %v625 = vpop.f32.mrf.mxu0
        %v626 = vadd.f32 %v607, %v625
        %v627 = vpop.f32.mrf.mxu0
        %v628 = vadd.f32 %v607, %v627
        %629 = vmatmul.bf16.gmra.mxu0 %v614
        %v630 = vpop.f32.mrf.mxu0
        %v631 = vadd.f32 %v607, %v630
        %v632 = vpop.f32.mrf.mxu0
        %v633 = vadd.f32 %v607, %v632
        %634 = vdwg.mxu0
        %v635 = vpack.c.bf16 %v590, %v589
        %v636 = vpack.c.bf16 %v592, %v591
        %v637 = vld [vmem:[#allocation11] sm:$0xff]
        %v638 = vld [vmem:[#allocation11 + $0x8] sm:$0xff]
        %v639 = vld [vmem:[#allocation11 + $0x10] sm:$0xff]
        %v640 = vld [vmem:[#allocation11 + $0x18] sm:$0xff]
        %v641 = vpack.c.bf16 %v638, %v637
        %v642 = vpack.c.bf16 %v640, %v639
        %v643 = vld [vmem:[%s6] sm:$0x1]
        %v645 = vperm.slane %v643, 0
        %v648 = vsel %vm609, %v635, 0
        %v651 = vsel %vm609, %v636, 0
        %653 = vmatpush.bf16.msra.mxu0 0
        %654 = vmatpush.bf16.msra.mxu0 0
        %655 = vmatpush.bf16.msra.mxu0 0
        %656 = vmatpush.bf16.msra.mxu0 0
        %657 = vmatpush.bf16.msra.mxu0 0
        %658 = vmatpush.bf16.msra.mxu0 0
        %659 = vmatpush.bf16.msra.mxu0 %v642
        %660 = vmatpush.bf16.msra.mxu0 %v641
        %661 = vmatmul.bf16.gmra.mxu0 %v648
        %v662 = vpop.f32.mrf.mxu0
        %v663 = vadd.f32 %v645, %v662
        %v664 = vpop.f32.mrf.mxu0
        %v665 = vadd.f32 %v645, %v664
        %666 = vmatmul.bf16.gmra.mxu0 %v651
        %v667 = vpop.f32.mrf.mxu0
        %v668 = vadd.f32 %v645, %v667
        %v669 = vpop.f32.mrf.mxu0
        %v670 = vadd.f32 %v645, %v669
        %671 = vdwg.mxu0
        %v672 = vpack.c.bf16 %v594, %v593
        %v673 = vpack.c.bf16 %v596, %v595
        %v674 = vld [vmem:[#allocation12] sm:$0xff]
        %v675 = vld [vmem:[#allocation12 + $0x8] sm:$0xff]
        %v676 = vld [vmem:[#allocation12 + $0x10] sm:$0xff]
        %v677 = vld [vmem:[#allocation12 + $0x18] sm:$0xff]
        %v678 = vpack.c.bf16 %v675, %v674
        %v679 = vpack.c.bf16 %v677, %v676
        %v680 = vld [vmem:[%s8] sm:$0x1]
        %v682 = vperm.slane %v680, 0
        %v685 = vsel %vm609, %v672, 0
        %v688 = vsel %vm609, %v673, 0
        %690 = vmatpush.bf16.msra.mxu0 0
        %691 = vmatpush.bf16.msra.mxu0 0
        %692 = vmatpush.bf16.msra.mxu0 0
        %693 = vmatpush.bf16.msra.mxu0 0
        %694 = vmatpush.bf16.msra.mxu0 0
        %695 = vmatpush.bf16.msra.mxu0 0
        %696 = vmatpush.bf16.msra.mxu0 %v679
        %697 = vmatpush.bf16.msra.mxu0 %v678
        %698 = vmatmul.bf16.gmra.mxu0 %v685
        %v699 = vpop.f32.mrf.mxu0
        %v700 = vadd.f32 %v682, %v699
        %v701 = vpop.f32.mrf.mxu0
        %v702 = vadd.f32 %v682, %v701
        %703 = vmatmul.bf16.gmra.mxu0 %v688
        %v704 = vpop.f32.mrf.mxu0
        %v705 = vadd.f32 %v682, %v704
        %v706 = vpop.f32.mrf.mxu0
        %v707 = vadd.f32 %v682, %v706
        %708 = vdwg.mxu0
        %v709 = vpack.c.bf16 %v626, %v626
        %v710 = vpack.c.bf16 %v628, %v628
        %v711 = vpack.c.bf16 %v631, %v631
        %v712 = vpack.c.bf16 %v633, %v633
        %v713 = vpack.c.bf16 %v663, %v663
        %v714 = vpack.c.bf16 %v665, %v665
        %v715 = vpack.c.bf16 %v668, %v668
        %v716 = vpack.c.bf16 %v670, %v670
        %v717 = vpack.c.bf16 %v700, %v700
        %v718 = vpack.c.bf16 %v702, %v702
        %v719 = vpack.c.bf16 %v705, %v705
        %v720 = vpack.c.bf16 %v707, %v707
        %vm721 = vcmask 64512
        %v723 = vsel %vm721, %v709, 0
        %v726 = vsel %vm721, %v713, 0
        %728 = vmatpush.bf16.xpose.msra.mxu0 0
        %729 = vmatpush.bf16.xpose.msra.mxu0 0
        %730 = vmatpush.bf16.xpose.msra.mxu0 0
        %731 = vmatpush.bf16.xpose.msra.mxu0 0
        %732 = vmatpush.bf16.xpose.msra.mxu0 0
        %733 = vmatpush.bf16.xpose.msra.mxu0 0
        %734 = vmatpush.bf16.xpose.msra.mxu0 0
        %735 = vmatpush.bf16.xpose.msra.mxu0 %v726
        %736 = vmatmul.bf16.gmra.mxu0 %v723
        %v737 = vpop.f32.mrf.mxu0
        %v738 = vadd.f32 0.0, %v737
        %v739 = vpop.f32.mrf.mxu0
        %740 = vdwg.mxu0
        %v742 = vsel %vm721, %v710, 0
        %v745 = vsel %vm721, %v714, 0
        %747 = vmatpush.bf16.xpose.msra.mxu0 0
        %748 = vmatpush.bf16.xpose.msra.mxu0 0
        %749 = vmatpush.bf16.xpose.msra.mxu0 0
        %750 = vmatpush.bf16.xpose.msra.mxu0 0
        %751 = vmatpush.bf16.xpose.msra.mxu0 0
        %752 = vmatpush.bf16.xpose.msra.mxu0 0
        %753 = vmatpush.bf16.xpose.msra.mxu0 0
        %754 = vmatpush.bf16.xpose.msra.mxu0 %v745
        %755 = vmatmul.bf16.gmra.mxu0 %v742
        %v756 = vpop.f32.mrf.mxu0
        %v757 = vadd.f32 0.0, %v756
        %v758 = vpop.f32.mrf.mxu0
        %759 = vdwg.mxu0
        %v761 = vsel %vm721, %v711, 0
        %v764 = vsel %vm721, %v715, 0
        %766 = vmatpush.bf16.xpose.msra.mxu0 0
        %767 = vmatpush.bf16.xpose.msra.mxu0 0
        %768 = vmatpush.bf16.xpose.msra.mxu0 0
        %769 = vmatpush.bf16.xpose.msra.mxu0 0
        %770 = vmatpush.bf16.xpose.msra.mxu0 0
        %771 = vmatpush.bf16.xpose.msra.mxu0 0
        %772 = vmatpush.bf16.xpose.msra.mxu0 0
        %773 = vmatpush.bf16.xpose.msra.mxu0 %v764
        %774 = vmatmul.bf16.gmra.mxu0 %v761
        %v775 = vpop.f32.mrf.mxu0
        %v776 = vadd.f32 0.0, %v775
        %v777 = vpop.f32.mrf.mxu0
        %778 = vdwg.mxu0
        %v780 = vsel %vm721, %v712, 0
        %v783 = vsel %vm721, %v716, 0
        %785 = vmatpush.bf16.xpose.msra.mxu0 0
        %786 = vmatpush.bf16.xpose.msra.mxu0 0
        %787 = vmatpush.bf16.xpose.msra.mxu0 0
        %788 = vmatpush.bf16.xpose.msra.mxu0 0
        %789 = vmatpush.bf16.xpose.msra.mxu0 0
        %790 = vmatpush.bf16.xpose.msra.mxu0 0
        %791 = vmatpush.bf16.xpose.msra.mxu0 0
        %792 = vmatpush.bf16.xpose.msra.mxu0 %v783
        %793 = vmatmul.bf16.gmra.mxu0 %v780
        %v794 = vpop.f32.mrf.mxu0
        %v795 = vadd.f32 0.0, %v794
        %v796 = vpop.f32.mrf.mxu0
        %797 = vdwg.mxu0
        %v798 = vsel %vm721, %v738, -inf
        %799 = vmax.xlane.f32.xlu0 %v798
        %v800 = vpop.xlane.xlu0 %799
        %v801 = vsel %vm721, %v757, -inf
        %802 = vmax.xlane.f32.xlu0 %v801
        %v803 = vpop.xlane.xlu0 %802
        %v804 = vsel %vm721, %v776, -inf
        %805 = vmax.xlane.f32.xlu0 %v804
        %v806 = vpop.xlane.xlu0 %805
        %v807 = vsel %vm721, %v795, -inf
        %808 = vmax.xlane.f32.xlu0 %v807
        %v809 = vpop.xlane.xlu0 %808
        %v810 = vsub.f32 %v738, %v800
        %v811 = vsub.f32 %v757, %v803
        %v812 = vsub.f32 %v776, %v806
        %v813 = vsub.f32 %v795, %v809
        %v814 = vmul.f32 %v810, 1.442695
        %v815 = vpow.pop %v814
        %v816 = vmul.f32 %v811, 1.442695
        %v817 = vpow.pop %v816
        %v818 = vmul.f32 %v812, 1.442695
        %v819 = vpow.pop %v818
        %v820 = vmul.f32 %v813, 1.442695
        %v821 = vpow.pop %v820
        %v822 = vsel %vm721, %v815, 0.0
        %823 = vadd.xlane.f32.xlu0 %v822
        %v824 = vpop.xlane.xlu0 %823
        %v825 = vsel %vm721, %v817, 0.0
        %826 = vadd.xlane.f32.xlu0 %v825
        %v827 = vpop.xlane.xlu0 %826
        %v828 = vsel %vm721, %v819, 0.0
        %829 = vadd.xlane.f32.xlu0 %v828
        %v830 = vpop.xlane.xlu0 %829
        %v831 = vsel %vm721, %v821, 0.0
        %832 = vadd.xlane.f32.xlu0 %v831
        %v833 = vpop.xlane.xlu0 %832
        %v834 = vrcp.pop %v824
        %v835 = vrcp.pop %v827
        %v836 = vrcp.pop %v830
        %v837 = vrcp.pop %v833
        %v838 = vmul.f32 %v815, %v834
        %v839 = vmul.f32 %v817, %v835
        %v840 = vmul.f32 %v819, %v836
        %v841 = vmul.f32 %v821, %v837
        %v842 = vpack.c.bf16 %v838, %v838
        %v843 = vpack.c.bf16 %v839, %v839
        %v844 = vpack.c.bf16 %v840, %v840
        %v845 = vpack.c.bf16 %v841, %v841
        %v847 = vsel %vm721, %v842, 0
        %vm849 = vcmask 1043456
        %v851 = vsel %vm849, %v717, 0
        %853 = vmatpush.bf16.msra.mxu0 0
        %854 = vmatpush.bf16.msra.mxu0 0
        %855 = vmatpush.bf16.msra.mxu0 0
        %856 = vmatpush.bf16.msra.mxu0 0
        %857 = vmatpush.bf16.msra.mxu0 0
        %858 = vmatpush.bf16.msra.mxu0 0
        %859 = vmatpush.bf16.msra.mxu0 0
        %860 = vmatpush.bf16.msra.mxu0 %v851
        %861 = vmatmul.bf16.gmra.mxu0 %v847
        %v862 = vpop.f32.mrf.mxu0
        %v863 = vadd.f32 0.0, %v862
        %v864 = vpop.f32.mrf.mxu0
        %865 = vdwg.mxu0
        %v867 = vsel %vm721, %v843, 0
        %v870 = vsel %vm849, %v718, 0
        %872 = vmatpush.bf16.msra.mxu0 0
        %873 = vmatpush.bf16.msra.mxu0 0
        %874 = vmatpush.bf16.msra.mxu0 0
        %875 = vmatpush.bf16.msra.mxu0 0
        %876 = vmatpush.bf16.msra.mxu0 0
        %877 = vmatpush.bf16.msra.mxu0 0
        %878 = vmatpush.bf16.msra.mxu0 0
        %879 = vmatpush.bf16.msra.mxu0 %v870
        %880 = vmatmul.bf16.gmra.mxu0 %v867
        %v881 = vpop.f32.mrf.mxu0
        %v882 = vadd.f32 0.0, %v881
        %v883 = vpop.f32.mrf.mxu0
        %884 = vdwg.mxu0
        %v886 = vsel %vm721, %v844, 0
        %v889 = vsel %vm849, %v719, 0
        %891 = vmatpush.bf16.msra.mxu0 0
        %892 = vmatpush.bf16.msra.mxu0 0
        %893 = vmatpush.bf16.msra.mxu0 0
        %894 = vmatpush.bf16.msra.mxu0 0
        %895 = vmatpush.bf16.msra.mxu0 0
        %896 = vmatpush.bf16.msra.mxu0 0
        %897 = vmatpush.bf16.msra.mxu0 0
        %898 = vmatpush.bf16.msra.mxu0 %v889
        %899 = vmatmul.bf16.gmra.mxu0 %v886
        %v900 = vpop.f32.mrf.mxu0
        %v901 = vadd.f32 0.0, %v900
        %v902 = vpop.f32.mrf.mxu0
        %903 = vdwg.mxu0
        %v905 = vsel %vm721, %v845, 0
        %v908 = vsel %vm849, %v720, 0
        %910 = vmatpush.bf16.msra.mxu0 0
        %911 = vmatpush.bf16.msra.mxu0 0
        %912 = vmatpush.bf16.msra.mxu0 0
        %913 = vmatpush.bf16.msra.mxu0 0
        %914 = vmatpush.bf16.msra.mxu0 0
        %915 = vmatpush.bf16.msra.mxu0 0
        %916 = vmatpush.bf16.msra.mxu0 0
        %917 = vmatpush.bf16.msra.mxu0 %v908
        %918 = vmatmul.bf16.gmra.mxu0 %v905
        %v919 = vpop.f32.mrf.mxu0
        %v920 = vadd.f32 0.0, %v919
        %v921 = vpop.f32.mrf.mxu0
        %922 = vdwg.mxu0
        %923 = vst.msk [vmem:[#allocation2] sm:$0xff] %vm721, %v863
        %924 = vst.msk [vmem:[#allocation2 + $0x8] sm:$0xff] %vm721, %v882
        %925 = vst.msk [vmem:[#allocation2 + $0x10] sm:$0xff] %vm721, %v901
        %926 = vst.msk [vmem:[#allocation2 + $0x18] sm:$0xff] %vm721, %v920
        %v928 = vunpack.c.l.b16 %v709
        %v929 = vpack.c.b16 %v928, %v928
        %930 = vrot.lane.b32.xlu0 %v929, 120
        %v931 = vpop.permute.xlu0 %930
        %v933 = vunpack.c.l.b16 %v713
        %v934 = vpack.c.b16 %v933, %v933
        %935 = vrot.lane.b32.xlu0 %v934, 120
        %v936 = vpop.permute.xlu0 %935
        %v938 = vsel %vm721, %v931, 0
        %v941 = vsel %vm721, %v936, 0
        %943 = vmatpush.bf16.xpose.msra.mxu0 0
        %944 = vmatpush.bf16.xpose.msra.mxu0 0
        %945 = vmatpush.bf16.xpose.msra.mxu0 0
        %946 = vmatpush.bf16.xpose.msra.mxu0 0
        %947 = vmatpush.bf16.xpose.msra.mxu0 0
        %948 = vmatpush.bf16.xpose.msra.mxu0 0
        %949 = vmatpush.bf16.xpose.msra.mxu0 0
        %950 = vmatpush.bf16.xpose.msra.mxu0 %v941
        %951 = vmatmul.bf16.gmra.mxu0 %v938
        %v952 = vpop.f32.mrf.mxu0
        %v953 = vadd.f32 0.0, %v952
        %v954 = vpop.f32.mrf.mxu0
        %955 = vdwg.mxu0
        %v957 = vunpack.c.l.b16 %v710
        %v958 = vpack.c.b16 %v957, %v957
        %959 = vrot.lane.b32.xlu0 %v958, 120
        %v960 = vpop.permute.xlu0 %959
        %v962 = vunpack.c.l.b16 %v714
        %v963 = vpack.c.b16 %v962, %v962
        %964 = vrot.lane.b32.xlu0 %v963, 120
        %v965 = vpop.permute.xlu0 %964
        %v967 = vsel %vm721, %v960, 0
        %v970 = vsel %vm721, %v965, 0
        %972 = vmatpush.bf16.xpose.msra.mxu0 0
        %973 = vmatpush.bf16.xpose.msra.mxu0 0
        %974 = vmatpush.bf16.xpose.msra.mxu0 0
        %975 = vmatpush.bf16.xpose.msra.mxu0 0
        %976 = vmatpush.bf16.xpose.msra.mxu0 0
        %977 = vmatpush.bf16.xpose.msra.mxu0 0
        %978 = vmatpush.bf16.xpose.msra.mxu0 0
        %979 = vmatpush.bf16.xpose.msra.mxu0 %v970
        %980 = vmatmul.bf16.gmra.mxu0 %v967
        %v981 = vpop.f32.mrf.mxu0
        %v982 = vadd.f32 0.0, %v981
        %v983 = vpop.f32.mrf.mxu0
        %984 = vdwg.mxu0
        %v986 = vunpack.c.l.b16 %v711
        %v987 = vpack.c.b16 %v986, %v986
        %988 = vrot.lane.b32.xlu0 %v987, 120
        %v989 = vpop.permute.xlu0 %988
        %v991 = vunpack.c.l.b16 %v715
        %v992 = vpack.c.b16 %v991, %v991
        %993 = vrot.lane.b32.xlu0 %v992, 120
        %v994 = vpop.permute.xlu0 %993
        %v996 = vsel %vm721, %v989, 0
        %v999 = vsel %vm721, %v994, 0
        %1001 = vmatpush.bf16.xpose.msra.mxu0 0
        %1002 = vmatpush.bf16.xpose.msra.mxu0 0
        %1003 = vmatpush.bf16.xpose.msra.mxu0 0
        %1004 = vmatpush.bf16.xpose.msra.mxu0 0
        %1005 = vmatpush.bf16.xpose.msra.mxu0 0
        %1006 = vmatpush.bf16.xpose.msra.mxu0 0
        %1007 = vmatpush.bf16.xpose.msra.mxu0 0
        %1008 = vmatpush.bf16.xpose.msra.mxu0 %v999
        %1009 = vmatmul.bf16.gmra.mxu0 %v996
        %v1010 = vpop.f32.mrf.mxu0
        %v1011 = vadd.f32 0.0, %v1010
        %v1012 = vpop.f32.mrf.mxu0
        %1013 = vdwg.mxu0
        %v1015 = vunpack.c.l.b16 %v712
        %v1016 = vpack.c.b16 %v1015, %v1015
        %1017 = vrot.lane.b32.xlu0 %v1016, 120
        %v1018 = vpop.permute.xlu0 %1017
        %v1020 = vunpack.c.l.b16 %v716
        %v1021 = vpack.c.b16 %v1020, %v1020
        %1022 = vrot.lane.b32.xlu0 %v1021, 120
        %v1023 = vpop.permute.xlu0 %1022
        %v1025 = vsel %vm721, %v1018, 0
        %v1028 = vsel %vm721, %v1023, 0
        %1030 = vmatpush.bf16.xpose.msra.mxu0 0
        %1031 = vmatpush.bf16.xpose.msra.mxu0 0
        %1032 = vmatpush.bf16.xpose.msra.mxu0 0
        %1033 = vmatpush.bf16.xpose.msra.mxu0 0
        %1034 = vmatpush.bf16.xpose.msra.mxu0 0
        %1035 = vmatpush.bf16.xpose.msra.mxu0 0
        %1036 = vmatpush.bf16.xpose.msra.mxu0 0
        %1037 = vmatpush.bf16.xpose.msra.mxu0 %v1028
        %1038 = vmatmul.bf16.gmra.mxu0 %v1025
        %v1039 = vpop.f32.mrf.mxu0
        %v1040 = vadd.f32 0.0, %v1039
        %v1041 = vpop.f32.mrf.mxu0
        %1042 = vdwg.mxu0
        %v1043 = vsel %vm721, %v953, -inf
        %1044 = vmax.xlane.f32.xlu0 %v1043
        %v1045 = vpop.xlane.xlu0 %1044
        %v1046 = vsel %vm721, %v982, -inf
        %1047 = vmax.xlane.f32.xlu0 %v1046
        %v1048 = vpop.xlane.xlu0 %1047
        %v1049 = vsel %vm721, %v1011, -inf
        %1050 = vmax.xlane.f32.xlu0 %v1049
        %v1051 = vpop.xlane.xlu0 %1050
        %v1052 = vsel %vm721, %v1040, -inf
        %1053 = vmax.xlane.f32.xlu0 %v1052
        %v1054 = vpop.xlane.xlu0 %1053
        %v1055 = vsub.f32 %v953, %v1045
        %v1056 = vsub.f32 %v982, %v1048
        %v1057 = vsub.f32 %v1011, %v1051
        %v1058 = vsub.f32 %v1040, %v1054
        %v1059 = vmul.f32 %v1055, 1.442695
        %v1060 = vpow.pop %v1059
        %v1061 = vmul.f32 %v1056, 1.442695
        %v1062 = vpow.pop %v1061
        %v1063 = vmul.f32 %v1057, 1.442695
        %v1064 = vpow.pop %v1063
        %v1065 = vmul.f32 %v1058, 1.442695
        %v1066 = vpow.pop %v1065
        %v1067 = vsel %vm721, %v1060, 0.0
        %1068 = vadd.xlane.f32.xlu0 %v1067
        %v1069 = vpop.xlane.xlu0 %1068
        %v1070 = vsel %vm721, %v1062, 0.0
        %1071 = vadd.xlane.f32.xlu0 %v1070
        %v1072 = vpop.xlane.xlu0 %1071
        %v1073 = vsel %vm721, %v1064, 0.0
        %1074 = vadd.xlane.f32.xlu0 %v1073
        %v1075 = vpop.xlane.xlu0 %1074
        %v1076 = vsel %vm721, %v1066, 0.0
        %1077 = vadd.xlane.f32.xlu0 %v1076
        %v1078 = vpop.xlane.xlu0 %1077
        %v1079 = vrcp.pop %v1069
        %v1080 = vrcp.pop %v1072
        %v1081 = vrcp.pop %v1075
        %v1082 = vrcp.pop %v1078
        %v1083 = vmul.f32 %v1060, %v1079
        %v1084 = vmul.f32 %v1062, %v1080
        %v1085 = vmul.f32 %v1064, %v1081
        %v1086 = vmul.f32 %v1066, %v1082
        %v1087 = vpack.c.bf16 %v1083, %v1083
        %v1088 = vpack.c.bf16 %v1084, %v1084
        %v1089 = vpack.c.bf16 %v1085, %v1085
        %v1090 = vpack.c.bf16 %v1086, %v1086
        %v1092 = vunpack.c.l.b16 %v717
        %v1093 = vpack.c.b16 %v1092, %v1092
        %1094 = vrot.lane.b32.xlu0 %v1093, 120
        %v1095 = vpop.permute.xlu0 %1094
        %v1097 = vsel %vm721, %v1087, 0
        %v1100 = vsel %vm849, %v1095, 0
        %1102 = vmatpush.bf16.msra.mxu0 0
        %1103 = vmatpush.bf16.msra.mxu0 0
        %1104 = vmatpush.bf16.msra.mxu0 0
        %1105 = vmatpush.bf16.msra.mxu0 0
        %1106 = vmatpush.bf16.msra.mxu0 0
        %1107 = vmatpush.bf16.msra.mxu0 0
        %1108 = vmatpush.bf16.msra.mxu0 0
        %1109 = vmatpush.bf16.msra.mxu0 %v1100
        %1110 = vmatmul.bf16.gmra.mxu0 %v1097
        %v1111 = vpop.f32.mrf.mxu0
        %v1112 = vadd.f32 0.0, %v1111
        %v1113 = vpop.f32.mrf.mxu0
        %1114 = vdwg.mxu0
        %v1116 = vunpack.c.l.b16 %v718
        %v1117 = vpack.c.b16 %v1116, %v1116
        %1118 = vrot.lane.b32.xlu0 %v1117, 120
        %v1119 = vpop.permute.xlu0 %1118
        %v1121 = vsel %vm721, %v1088, 0
        %v1124 = vsel %vm849, %v1119, 0
        %1126 = vmatpush.bf16.msra.mxu0 0
        %1127 = vmatpush.bf16.msra.mxu0 0
        %1128 = vmatpush.bf16.msra.mxu0 0
        %1129 = vmatpush.bf16.msra.mxu0 0
        %1130 = vmatpush.bf16.msra.mxu0 0
        %1131 = vmatpush.bf16.msra.mxu0 0
        %1132 = vmatpush.bf16.msra.mxu0 0
        %1133 = vmatpush.bf16.msra.mxu0 %v1124
        %1134 = vmatmul.bf16.gmra.mxu0 %v1121
        %v1135 = vpop.f32.mrf.mxu0
        %v1136 = vadd.f32 0.0, %v1135
        %v1137 = vpop.f32.mrf.mxu0
        %1138 = vdwg.mxu0
        %v1140 = vunpack.c.l.b16 %v719
        %v1141 = vpack.c.b16 %v1140, %v1140
        %1142 = vrot.lane.b32.xlu0 %v1141, 120
        %v1143 = vpop.permute.xlu0 %1142
        %v1145 = vsel %vm721, %v1089, 0
        %v1148 = vsel %vm849, %v1143, 0
        %1150 = vmatpush.bf16.msra.mxu0 0
        %1151 = vmatpush.bf16.msra.mxu0 0
        %1152 = vmatpush.bf16.msra.mxu0 0
        %1153 = vmatpush.bf16.msra.mxu0 0
        %1154 = vmatpush.bf16.msra.mxu0 0
        %1155 = vmatpush.bf16.msra.mxu0 0
        %1156 = vmatpush.bf16.msra.mxu0 0
        %1157 = vmatpush.bf16.msra.mxu0 %v1148
        %1158 = vmatmul.bf16.gmra.mxu0 %v1145
        %v1159 = vpop.f32.mrf.mxu0
        %v1160 = vadd.f32 0.0, %v1159
        %v1161 = vpop.f32.mrf.mxu0
        %1162 = vdwg.mxu0
        %v1164 = vunpack.c.l.b16 %v720
        %v1165 = vpack.c.b16 %v1164, %v1164
        %1166 = vrot.lane.b32.xlu0 %v1165, 120
        %v1167 = vpop.permute.xlu0 %1166
        %v1169 = vsel %vm721, %v1090, 0
        %v1172 = vsel %vm849, %v1167, 0
        %1174 = vmatpush.bf16.msra.mxu0 0
        %1175 = vmatpush.bf16.msra.mxu0 0
        %1176 = vmatpush.bf16.msra.mxu0 0
        %1177 = vmatpush.bf16.msra.mxu0 0
        %1178 = vmatpush.bf16.msra.mxu0 0
        %1179 = vmatpush.bf16.msra.mxu0 0
        %1180 = vmatpush.bf16.msra.mxu0 0
        %1181 = vmatpush.bf16.msra.mxu0 %v1172
        %1182 = vmatmul.bf16.gmra.mxu0 %v1169
        %v1183 = vpop.f32.mrf.mxu0
        %v1184 = vadd.f32 0.0, %v1183
        %v1185 = vpop.f32.mrf.mxu0
        %1186 = vdwg.mxu0
        %1191 = vrot.lane.b32.xlu0 %v1112, 8
        %v1192 = vpop.permute.xlu0 %1191
        %1193 = vrot.lane.b32.xlu0 %v1136, 8
        %v1194 = vpop.permute.xlu0 %1193
        %1195 = vrot.lane.b32.xlu0 %v1160, 8
        %v1196 = vpop.permute.xlu0 %1195
        %1197 = vrot.lane.b32.xlu0 %v1184, 8
        %v1198 = vpop.permute.xlu0 %1197
        %vm1203 = vcmask 130112
        %1204 = vst.msk [vmem:[#allocation2] sm:$0xff] %vm1203, %v1192
        %1205 = vst.msk [vmem:[#allocation2 + $0x8] sm:$0xff] %vm1203, %v1194
        %1206 = vst.msk [vmem:[#allocation2 + $0x10] sm:$0xff] %vm1203, %v1196
        %1207 = vst.msk [vmem:[#allocation2 + $0x18] sm:$0xff] %vm1203, %v1198
        %1208 = vrot.lane.b32.xlu0 %v929, 112
        %v1209 = vpop.permute.xlu0 %1208
        %1210 = vrot.lane.b32.xlu0 %v934, 112
        %v1211 = vpop.permute.xlu0 %1210
        %v1213 = vsel %vm721, %v1209, 0
        %v1216 = vsel %vm721, %v1211, 0
        %1218 = vmatpush.bf16.xpose.msra.mxu0 0
        %1219 = vmatpush.bf16.xpose.msra.mxu0 0
        %1220 = vmatpush.bf16.xpose.msra.mxu0 0
        %1221 = vmatpush.bf16.xpose.msra.mxu0 0
        %1222 = vmatpush.bf16.xpose.msra.mxu0 0
        %1223 = vmatpush.bf16.xpose.msra.mxu0 0
        %1224 = vmatpush.bf16.xpose.msra.mxu0 0
        %1225 = vmatpush.bf16.xpose.msra.mxu0 %v1216
        %1226 = vmatmul.bf16.gmra.mxu0 %v1213
        %v1227 = vpop.f32.mrf.mxu0
        %v1228 = vadd.f32 0.0, %v1227
        %v1229 = vpop.f32.mrf.mxu0
        %1230 = vdwg.mxu0
        %1231 = vrot.lane.b32.xlu0 %v958, 112
        %v1232 = vpop.permute.xlu0 %1231
        %1233 = vrot.lane.b32.xlu0 %v963, 112
        %v1234 = vpop.permute.xlu0 %1233
        %v1236 = vsel %vm721, %v1232, 0
        %v1239 = vsel %vm721, %v1234, 0
        %1241 = vmatpush.bf16.xpose.msra.mxu0 0
        %1242 = vmatpush.bf16.xpose.msra.mxu0 0
        %1243 = vmatpush.bf16.xpose.msra.mxu0 0
        %1244 = vmatpush.bf16.xpose.msra.mxu0 0
        %1245 = vmatpush.bf16.xpose.msra.mxu0 0
        %1246 = vmatpush.bf16.xpose.msra.mxu0 0
        %1247 = vmatpush.bf16.xpose.msra.mxu0 0
        %1248 = vmatpush.bf16.xpose.msra.mxu0 %v1239
        %1249 = vmatmul.bf16.gmra.mxu0 %v1236
        %v1250 = vpop.f32.mrf.mxu0
        %v1251 = vadd.f32 0.0, %v1250
        %v1252 = vpop.f32.mrf.mxu0
        %1253 = vdwg.mxu0
        %1254 = vrot.lane.b32.xlu0 %v987, 112
        %v1255 = vpop.permute.xlu0 %1254
        %1256 = vrot.lane.b32.xlu0 %v992, 112
        %v1257 = vpop.permute.xlu0 %1256
        %v1259 = vsel %vm721, %v1255, 0
        %v1262 = vsel %vm721, %v1257, 0
        %1264 = vmatpush.bf16.xpose.msra.mxu0 0
        %1265 = vmatpush.bf16.xpose.msra.mxu0 0
        %1266 = vmatpush.bf16.xpose.msra.mxu0 0
        %1267 = vmatpush.bf16.xpose.msra.mxu0 0
        %1268 = vmatpush.bf16.xpose.msra.mxu0 0
        %1269 = vmatpush.bf16.xpose.msra.mxu0 0
        %1270 = vmatpush.bf16.xpose.msra.mxu0 0
        %1271 = vmatpush.bf16.xpose.msra.mxu0 %v1262
        %1272 = vmatmul.bf16.gmra.mxu0 %v1259
        %v1273 = vpop.f32.mrf.mxu0
        %v1274 = vadd.f32 0.0, %v1273
        %v1275 = vpop.f32.mrf.mxu0
        %1276 = vdwg.mxu0
        %1277 = vrot.lane.b32.xlu0 %v1016, 112
        %v1278 = vpop.permute.xlu0 %1277
        %1279 = vrot.lane.b32.xlu0 %v1021, 112
        %v1280 = vpop.permute.xlu0 %1279
        %v1282 = vsel %vm721, %v1278, 0
        %v1285 = vsel %vm721, %v1280, 0
        %1287 = vmatpush.bf16.xpose.msra.mxu0 0
        %1288 = vmatpush.bf16.xpose.msra.mxu0 0
        %1289 = vmatpush.bf16.xpose.msra.mxu0 0
        %1290 = vmatpush.bf16.xpose.msra.mxu0 0
        %1291 = vmatpush.bf16.xpose.msra.mxu0 0
        %1292 = vmatpush.bf16.xpose.msra.mxu0 0
        %1293 = vmatpush.bf16.xpose.msra.mxu0 0
        %1294 = vmatpush.bf16.xpose.msra.mxu0 %v1285
        %1295 = vmatmul.bf16.gmra.mxu0 %v1282
        %v1296 = vpop.f32.mrf.mxu0
        %v1297 = vadd.f32 0.0, %v1296
        %v1298 = vpop.f32.mrf.mxu0
        %1299 = vdwg.mxu0
        %v1300 = vsel %vm721, %v1228, -inf
        %1301 = vmax.xlane.f32.xlu0 %v1300
        %v1302 = vpop.xlane.xlu0 %1301
        %v1303 = vsel %vm721, %v1251, -inf
        %1304 = vmax.xlane.f32.xlu0 %v1303
        %v1305 = vpop.xlane.xlu0 %1304
        %v1306 = vsel %vm721, %v1274, -inf
        %1307 = vmax.xlane.f32.xlu0 %v1306
        %v1308 = vpop.xlane.xlu0 %1307
        %v1309 = vsel %vm721, %v1297, -inf
        %1310 = vmax.xlane.f32.xlu0 %v1309
        %v1311 = vpop.xlane.xlu0 %1310
        %v1312 = vsub.f32 %v1228, %v1302
        %v1313 = vsub.f32 %v1251, %v1305
        %v1314 = vsub.f32 %v1274, %v1308
        %v1315 = vsub.f32 %v1297, %v1311
        %v1316 = vmul.f32 %v1312, 1.442695
        %v1317 = vpow.pop %v1316
        %v1318 = vmul.f32 %v1313, 1.442695
        %v1319 = vpow.pop %v1318
        %v1320 = vmul.f32 %v1314, 1.442695
        %v1321 = vpow.pop %v1320
        %v1322 = vmul.f32 %v1315, 1.442695
        %v1323 = vpow.pop %v1322
        %v1324 = vsel %vm721, %v1317, 0.0
        %1325 = vadd.xlane.f32.xlu0 %v1324
        %v1326 = vpop.xlane.xlu0 %1325
        %v1327 = vsel %vm721, %v1319, 0.0
        %1328 = vadd.xlane.f32.xlu0 %v1327
        %v1329 = vpop.xlane.xlu0 %1328
        %v1330 = vsel %vm721, %v1321, 0.0
        %1331 = vadd.xlane.f32.xlu0 %v1330
        %v1332 = vpop.xlane.xlu0 %1331
        %v1333 = vsel %vm721, %v1323, 0.0
        %1334 = vadd.xlane.f32.xlu0 %v1333
        %v1335 = vpop.xlane.xlu0 %1334
        %v1336 = vrcp.pop %v1326
        %v1337 = vrcp.pop %v1329
        %v1338 = vrcp.pop %v1332
        %v1339 = vrcp.pop %v1335
        %v1340 = vmul.f32 %v1317, %v1336
        %v1341 = vmul.f32 %v1319, %v1337
        %v1342 = vmul.f32 %v1321, %v1338
        %v1343 = vmul.f32 %v1323, %v1339
        %v1344 = vpack.c.bf16 %v1340, %v1340
        %v1345 = vpack.c.bf16 %v1341, %v1341
        %v1346 = vpack.c.bf16 %v1342, %v1342
        %v1347 = vpack.c.bf16 %v1343, %v1343
        %1348 = vrot.lane.b32.xlu0 %v1093, 112
        %v1349 = vpop.permute.xlu0 %1348
        %v1351 = vsel %vm721, %v1344, 0
        %v1354 = vsel %vm849, %v1349, 0
        %1356 = vmatpush.bf16.msra.mxu0 0
        %1357 = vmatpush.bf16.msra.mxu0 0
        %1358 = vmatpush.bf16.msra.mxu0 0
        %1359 = vmatpush.bf16.msra.mxu0 0
        %1360 = vmatpush.bf16.msra.mxu0 0
        %1361 = vmatpush.bf16.msra.mxu0 0
        %1362 = vmatpush.bf16.msra.mxu0 0
        %1363 = vmatpush.bf16.msra.mxu0 %v1354
        %1364 = vmatmul.bf16.gmra.mxu0 %v1351
        %v1365 = vpop.f32.mrf.mxu0
        %v1366 = vadd.f32 0.0, %v1365
        %v1367 = vpop.f32.mrf.mxu0
        %1368 = vdwg.mxu0
        %1369 = vrot.lane.b32.xlu0 %v1117, 112
        %v1370 = vpop.permute.xlu0 %1369
        %v1372 = vsel %vm721, %v1345, 0
        %v1375 = vsel %vm849, %v1370, 0
        %1377 = vmatpush.bf16.msra.mxu0 0
        %1378 = vmatpush.bf16.msra.mxu0 0
        %1379 = vmatpush.bf16.msra.mxu0 0
        %1380 = vmatpush.bf16.msra.mxu0 0
        %1381 = vmatpush.bf16.msra.mxu0 0
        %1382 = vmatpush.bf16.msra.mxu0 0
        %1383 = vmatpush.bf16.msra.mxu0 0
        %1384 = vmatpush.bf16.msra.mxu0 %v1375
        %1385 = vmatmul.bf16.gmra.mxu0 %v1372
        %v1386 = vpop.f32.mrf.mxu0
        %v1387 = vadd.f32 0.0, %v1386
        %v1388 = vpop.f32.mrf.mxu0
        %1389 = vdwg.mxu0
        %1390 = vrot.lane.b32.xlu0 %v1141, 112
        %v1391 = vpop.permute.xlu0 %1390
        %v1393 = vsel %vm721, %v1346, 0
        %v1396 = vsel %vm849, %v1391, 0
        %1398 = vmatpush.bf16.msra.mxu0 0
        %1399 = vmatpush.bf16.msra.mxu0 0
        %1400 = vmatpush.bf16.msra.mxu0 0
        %1401 = vmatpush.bf16.msra.mxu0 0
        %1402 = vmatpush.bf16.msra.mxu0 0
        %1403 = vmatpush.bf16.msra.mxu0 0
        %1404 = vmatpush.bf16.msra.mxu0 0
        %1405 = vmatpush.bf16.msra.mxu0 %v1396
        %1406 = vmatmul.bf16.gmra.mxu0 %v1393
        %v1407 = vpop.f32.mrf.mxu0
        %v1408 = vadd.f32 0.0, %v1407
        %v1409 = vpop.f32.mrf.mxu0
        %1410 = vdwg.mxu0
        %1411 = vrot.lane.b32.xlu0 %v1165, 112
        %v1412 = vpop.permute.xlu0 %1411
        %v1414 = vsel %vm721, %v1347, 0
        %v1417 = vsel %vm849, %v1412, 0
        %1419 = vmatpush.bf16.msra.mxu0 0
        %1420 = vmatpush.bf16.msra.mxu0 0
        %1421 = vmatpush.bf16.msra.mxu0 0
        %1422 = vmatpush.bf16.msra.mxu0 0
        %1423 = vmatpush.bf16.msra.mxu0 0
        %1424 = vmatpush.bf16.msra.mxu0 0
        %1425 = vmatpush.bf16.msra.mxu0 0
        %1426 = vmatpush.bf16.msra.mxu0 %v1417
        %1427 = vmatmul.bf16.gmra.mxu0 %v1414
        %v1428 = vpop.f32.mrf.mxu0
        %v1429 = vadd.f32 0.0, %v1428
        %v1430 = vpop.f32.mrf.mxu0
        %1431 = vdwg.mxu0
        %1436 = vrot.lane.b32.xlu0 %v1366, 16
        %v1437 = vpop.permute.xlu0 %1436
        %1438 = vrot.lane.b32.xlu0 %v1387, 16
        %v1439 = vpop.permute.xlu0 %1438
        %1440 = vrot.lane.b32.xlu0 %v1408, 16
        %v1441 = vpop.permute.xlu0 %1440
        %1442 = vrot.lane.b32.xlu0 %v1429, 16
        %v1443 = vpop.permute.xlu0 %1442
        %vm1448 = vcmask 195712
        %1449 = vst.msk [vmem:[#allocation2] sm:$0xff] %vm1448, %v1437
        %1450 = vst.msk [vmem:[#allocation2 + $0x8] sm:$0xff] %vm1448, %v1439
        %1451 = vst.msk [vmem:[#allocation2 + $0x10] sm:$0xff] %vm1448, %v1441
        %1452 = vst.msk [vmem:[#allocation2 + $0x18] sm:$0xff] %vm1448, %v1443
        %1453 = vrot.lane.b32.xlu0 %v929, 104
        %v1454 = vpop.permute.xlu0 %1453
        %1455 = vrot.lane.b32.xlu0 %v934, 104
        %v1456 = vpop.permute.xlu0 %1455
        %v1458 = vsel %vm721, %v1454, 0
        %v1461 = vsel %vm721, %v1456, 0
        %1463 = vmatpush.bf16.xpose.msra.mxu0 0
        %1464 = vmatpush.bf16.xpose.msra.mxu0 0
        %1465 = vmatpush.bf16.xpose.msra.mxu0 0
        %1466 = vmatpush.bf16.xpose.msra.mxu0 0
        %1467 = vmatpush.bf16.xpose.msra.mxu0 0
        %1468 = vmatpush.bf16.xpose.msra.mxu0 0
        %1469 = vmatpush.bf16.xpose.msra.mxu0 0
        %1470 = vmatpush.bf16.xpose.msra.mxu0 %v1461
        %1471 = vmatmul.bf16.gmra.mxu0 %v1458
        %v1472 = vpop.f32.mrf.mxu0
        %v1473 = vadd.f32 0.0, %v1472
        %v1474 = vpop.f32.mrf.mxu0
        %1475 = vdwg.mxu0
        %1476 = vrot.lane.b32.xlu0 %v958, 104
        %v1477 = vpop.permute.xlu0 %1476
        %1478 = vrot.lane.b32.xlu0 %v963, 104
        %v1479 = vpop.permute.xlu0 %1478
        %v1481 = vsel %vm721, %v1477, 0
        %v1484 = vsel %vm721, %v1479, 0
        %1486 = vmatpush.bf16.xpose.msra.mxu0 0
        %1487 = vmatpush.bf16.xpose.msra.mxu0 0
        %1488 = vmatpush.bf16.xpose.msra.mxu0 0
        %1489 = vmatpush.bf16.xpose.msra.mxu0 0
        %1490 = vmatpush.bf16.xpose.msra.mxu0 0
        %1491 = vmatpush.bf16.xpose.msra.mxu0 0
        %1492 = vmatpush.bf16.xpose.msra.mxu0 0
        %1493 = vmatpush.bf16.xpose.msra.mxu0 %v1484
        %1494 = vmatmul.bf16.gmra.mxu0 %v1481
        %v1495 = vpop.f32.mrf.mxu0
        %v1496 = vadd.f32 0.0, %v1495
        %v1497 = vpop.f32.mrf.mxu0
        %1498 = vdwg.mxu0
        %1499 = vrot.lane.b32.xlu0 %v987, 104
        %v1500 = vpop.permute.xlu0 %1499
        %1501 = vrot.lane.b32.xlu0 %v992, 104
        %v1502 = vpop.permute.xlu0 %1501
        %v1504 = vsel %vm721, %v1500, 0
        %v1507 = vsel %vm721, %v1502, 0
        %1509 = vmatpush.bf16.xpose.msra.mxu0 0
        %1510 = vmatpush.bf16.xpose.msra.mxu0 0
        %1511 = vmatpush.bf16.xpose.msra.mxu0 0
        %1512 = vmatpush.bf16.xpose.msra.mxu0 0
        %1513 = vmatpush.bf16.xpose.msra.mxu0 0
        %1514 = vmatpush.bf16.xpose.msra.mxu0 0
        %1515 = vmatpush.bf16.xpose.msra.mxu0 0
        %1516 = vmatpush.bf16.xpose.msra.mxu0 %v1507
        %1517 = vmatmul.bf16.gmra.mxu0 %v1504
        %v1518 = vpop.f32.mrf.mxu0
        %v1519 = vadd.f32 0.0, %v1518
        %v1520 = vpop.f32.mrf.mxu0
        %1521 = vdwg.mxu0
        %1522 = vrot.lane.b32.xlu0 %v1016, 104
        %v1523 = vpop.permute.xlu0 %1522
        %1524 = vrot.lane.b32.xlu0 %v1021, 104
        %v1525 = vpop.permute.xlu0 %1524
        %v1527 = vsel %vm721, %v1523, 0
        %v1530 = vsel %vm721, %v1525, 0
        %1532 = vmatpush.bf16.xpose.msra.mxu0 0
        %1533 = vmatpush.bf16.xpose.msra.mxu0 0
        %1534 = vmatpush.bf16.xpose.msra.mxu0 0
        %1535 = vmatpush.bf16.xpose.msra.mxu0 0
        %1536 = vmatpush.bf16.xpose.msra.mxu0 0
        %1537 = vmatpush.bf16.xpose.msra.mxu0 0
        %1538 = vmatpush.bf16.xpose.msra.mxu0 0
        %1539 = vmatpush.bf16.xpose.msra.mxu0 %v1530
        %1540 = vmatmul.bf16.gmra.mxu0 %v1527
        %v1541 = vpop.f32.mrf.mxu0
        %v1542 = vadd.f32 0.0, %v1541
        %v1543 = vpop.f32.mrf.mxu0
        %1544 = vdwg.mxu0
        %v1545 = vsel %vm721, %v1473, -inf
        %1546 = vmax.xlane.f32.xlu0 %v1545
        %v1547 = vpop.xlane.xlu0 %1546
        %v1548 = vsel %vm721, %v1496, -inf
        %1549 = vmax.xlane.f32.xlu0 %v1548
        %v1550 = vpop.xlane.xlu0 %1549
        %v1551 = vsel %vm721, %v1519, -inf
        %1552 = vmax.xlane.f32.xlu0 %v1551
        %v1553 = vpop.xlane.xlu0 %1552
        %v1554 = vsel %vm721, %v1542, -inf
        %1555 = vmax.xlane.f32.xlu0 %v1554
        %v1556 = vpop.xlane.xlu0 %1555
        %v1557 = vsub.f32 %v1473, %v1547
        %v1558 = vsub.f32 %v1496, %v1550
        %v1559 = vsub.f32 %v1519, %v1553
        %v1560 = vsub.f32 %v1542, %v1556
        %v1561 = vmul.f32 %v1557, 1.442695
        %v1562 = vpow.pop %v1561
        %v1563 = vmul.f32 %v1558, 1.442695
        %v1564 = vpow.pop %v1563
        %v1565 = vmul.f32 %v1559, 1.442695
        %v1566 = vpow.pop %v1565
        %v1567 = vmul.f32 %v1560, 1.442695
        %v1568 = vpow.pop %v1567
        %v1569 = vsel %vm721, %v1562, 0.0
        %1570 = vadd.xlane.f32.xlu0 %v1569
        %v1571 = vpop.xlane.xlu0 %1570
        %v1572 = vsel %vm721, %v1564, 0.0
        %1573 = vadd.xlane.f32.xlu0 %v1572
        %v1574 = vpop.xlane.xlu0 %1573
        %v1575 = vsel %vm721, %v1566, 0.0
        %1576 = vadd.xlane.f32.xlu0 %v1575
        %v1577 = vpop.xlane.xlu0 %1576
        %v1578 = vsel %vm721, %v1568, 0.0
        %1579 = vadd.xlane.f32.xlu0 %v1578
        %v1580 = vpop.xlane.xlu0 %1579
        %v1581 = vrcp.pop %v1571
        %v1582 = vrcp.pop %v1574
        %v1583 = vrcp.pop %v1577
        %v1584 = vrcp.pop %v1580
        %v1585 = vmul.f32 %v1562, %v1581
        %v1586 = vmul.f32 %v1564, %v1582
        %v1587 = vmul.f32 %v1566, %v1583
        %v1588 = vmul.f32 %v1568, %v1584
        %v1589 = vpack.c.bf16 %v1585, %v1585
        %v1590 = vpack.c.bf16 %v1586, %v1586
        %v1591 = vpack.c.bf16 %v1587, %v1587
        %v1592 = vpack.c.bf16 %v1588, %v1588
        %1593 = vrot.lane.b32.xlu0 %v1093, 104
        %v1594 = vpop.permute.xlu0 %1593
        %v1596 = vsel %vm721, %v1589, 0
        %v1599 = vsel %vm849, %v1594, 0
        %1601 = vmatpush.bf16.msra.mxu0 0
        %1602 = vmatpush.bf16.msra.mxu0 0
        %1603 = vmatpush.bf16.msra.mxu0 0
        %1604 = vmatpush.bf16.msra.mxu0 0
        %1605 = vmatpush.bf16.msra.mxu0 0
        %1606 = vmatpush.bf16.msra.mxu0 0
        %1607 = vmatpush.bf16.msra.mxu0 0
        %1608 = vmatpush.bf16.msra.mxu0 %v1599
        %1609 = vmatmul.bf16.gmra.mxu0 %v1596
        %v1610 = vpop.f32.mrf.mxu0
        %v1611 = vadd.f32 0.0, %v1610
        %v1612 = vpop.f32.mrf.mxu0
        %1613 = vdwg.mxu0
        %1614 = vrot.lane.b32.xlu0 %v1117, 104
        %v1615 = vpop.permute.xlu0 %1614
        %v1617 = vsel %vm721, %v1590, 0
        %v1620 = vsel %vm849, %v1615, 0
        %1622 = vmatpush.bf16.msra.mxu0 0
        %1623 = vmatpush.bf16.msra.mxu0 0
        %1624 = vmatpush.bf16.msra.mxu0 0
        %1625 = vmatpush.bf16.msra.mxu0 0
        %1626 = vmatpush.bf16.msra.mxu0 0
        %1627 = vmatpush.bf16.msra.mxu0 0
        %1628 = vmatpush.bf16.msra.mxu0 0
        %1629 = vmatpush.bf16.msra.mxu0 %v1620
        %1630 = vmatmul.bf16.gmra.mxu0 %v1617
        %v1631 = vpop.f32.mrf.mxu0
        %v1632 = vadd.f32 0.0, %v1631
        %v1633 = vpop.f32.mrf.mxu0
        %1634 = vdwg.mxu0
        %1635 = vrot.lane.b32.xlu0 %v1141, 104
        %v1636 = vpop.permute.xlu0 %1635
        %v1638 = vsel %vm721, %v1591, 0
        %v1641 = vsel %vm849, %v1636, 0
        %1643 = vmatpush.bf16.msra.mxu0 0
        %1644 = vmatpush.bf16.msra.mxu0 0
        %1645 = vmatpush.bf16.msra.mxu0 0
        %1646 = vmatpush.bf16.msra.mxu0 0
        %1647 = vmatpush.bf16.msra.mxu0 0
        %1648 = vmatpush.bf16.msra.mxu0 0
        %1649 = vmatpush.bf16.msra.mxu0 0
        %1650 = vmatpush.bf16.msra.mxu0 %v1641
        %1651 = vmatmul.bf16.gmra.mxu0 %v1638
        %v1652 = vpop.f32.mrf.mxu0
        %v1653 = vadd.f32 0.0, %v1652
        %v1654 = vpop.f32.mrf.mxu0
        %1655 = vdwg.mxu0
        %1656 = vrot.lane.b32.xlu0 %v1165, 104
        %v1657 = vpop.permute.xlu0 %1656
        %v1659 = vsel %vm721, %v1592, 0
        %v1662 = vsel %vm849, %v1657, 0
        %1664 = vmatpush.bf16.msra.mxu0 0
        %1665 = vmatpush.bf16.msra.mxu0 0
        %1666 = vmatpush.bf16.msra.mxu0 0
        %1667 = vmatpush.bf16.msra.mxu0 0
        %1668 = vmatpush.bf16.msra.mxu0 0
        %1669 = vmatpush.bf16.msra.mxu0 0
        %1670 = vmatpush.bf16.msra.mxu0 0
        %1671 = vmatpush.bf16.msra.mxu0 %v1662
        %1672 = vmatmul.bf16.gmra.mxu0 %v1659
        %v1673 = vpop.f32.mrf.mxu0
        %v1674 = vadd.f32 0.0, %v1673
        %v1675 = vpop.f32.mrf.mxu0
        %1676 = vdwg.mxu0
        %1681 = vrot.lane.b32.xlu0 %v1611, 24
        %v1682 = vpop.permute.xlu0 %1681
        %1683 = vrot.lane.b32.xlu0 %v1632, 24
        %v1684 = vpop.permute.xlu0 %1683
        %1685 = vrot.lane.b32.xlu0 %v1653, 24
        %v1686 = vpop.permute.xlu0 %1685
        %1687 = vrot.lane.b32.xlu0 %v1674, 24
        %v1688 = vpop.permute.xlu0 %1687
        %vm1693 = vcmask 261312
        %1694 = vst.msk [vmem:[#allocation2] sm:$0xff] %vm1693, %v1682
        %1695 = vst.msk [vmem:[#allocation2 + $0x8] sm:$0xff] %vm1693, %v1684
        %1696 = vst.msk [vmem:[#allocation2 + $0x10] sm:$0xff] %vm1693, %v1686
        %1697 = vst.msk [vmem:[#allocation2 + $0x18] sm:$0xff] %vm1693, %v1688
        %v1698 = vld [vmem:[#allocation2] sm:$0xff]
        %v1699 = vld [vmem:[#allocation2 + $0x8] sm:$0xff]
        %v1700 = vld [vmem:[#allocation2 + $0x10] sm:$0xff]
        %v1701 = vld [vmem:[#allocation2 + $0x18] sm:$0xff]
        %v1702 = vpack.c.bf16 %v1699, %v1698
        %v1703 = vpack.c.bf16 %v1701, %v1700
        %v1704 = vld [vmem:[#allocation14] sm:$0xff]
        %v1705 = vld [vmem:[#allocation14 + $0x8] sm:$0xff]
        %v1706 = vld [vmem:[#allocation14 + $0x10] sm:$0xff]
        %v1707 = vld [vmem:[#allocation14 + $0x18] sm:$0xff]
        %v1708 = vpack.c.bf16 %v1705, %v1704
        %v1709 = vpack.c.bf16 %v1707, %v1706
        %v1710 = vld [vmem:[%s10] sm:$0x1]
        %v1712 = vperm.slane %v1710, 0
        %v1715 = vsel %vm609, %v1702, 0
        %v1718 = vsel %vm609, %v1703, 0
        %1720 = vmatpush.bf16.msra.mxu0 0
        %1721 = vmatpush.bf16.msra.mxu0 0
        %1722 = vmatpush.bf16.msra.mxu0 0
        %1723 = vmatpush.bf16.msra.mxu0 0
        %1724 = vmatpush.bf16.msra.mxu0 0
        %1725 = vmatpush.bf16.msra.mxu0 0
        %1726 = vmatpush.bf16.msra.mxu0 %v1709
        %1727 = vmatpush.bf16.msra.mxu0 %v1708
        %1728 = vmatmul.bf16.gmra.mxu0 %v1715
        %v1729 = vpop.f32.mrf.mxu0
        %v1730 = vadd.f32 %v1712, %v1729
        %v1731 = vpop.f32.mrf.mxu0
        %v1732 = vadd.f32 %v1712, %v1731
        %1733 = vmatmul.bf16.gmra.mxu0 %v1718
        %v1734 = vpop.f32.mrf.mxu0
        %v1735 = vadd.f32 %v1712, %v1734
        %v1736 = vpop.f32.mrf.mxu0
        %v1737 = vadd.f32 %v1712, %v1736
        %1738 = vdwg.mxu0
        %1739 = vst.msk [vmem:[%s579] sm:$0xff] %vm609, %v1730
        %1740 = vst.msk [vmem:[%s579 + $0x8] sm:$0xff] %vm609, %v1732
        %1741 = vst.msk [vmem:[%s579 + $0x10] sm:$0xff] %vm609, %v1735
        %1742 = vst.msk [vmem:[%s579 + $0x18] sm:$0xff] %vm609, %v1737
        %s1743 = sand.u32 %s307, 1
        %s1744 = scalar_lea.sflag [#allocation5], %s1743
        %s1745 = sand.u32 %s307, 1
        %s1746 = smul.addr %s1745, 32
        %s1747 = scalar_lea.vmem [#allocation15], %s1746
        // Predicated region
        $region93: #{tpu_custom_call.1} parent=63 // pred_check
          %p1748 = pneg %p317
        $region94: #{tpu_custom_call.1} parent=63 // pred_check_branch
          %1750 = sbr.rel (%p1748) target = $region96
        $region95: #{tpu_custom_call.1} parent=63 // pred_region
          %s1751 = smul.u32 4, %s38
          %1753 = vsyncadd %s1744, 0
          %s1754 = smul.addr %s37, 4
          %s1755 = sadd.s32 %s1751, %s1754
          %s1756 = smul.addr %s1755, 8
          %s1757 = scalar_lea.hbm %s11, %s1756
          %s1758 = sshll.u32 %s1747, 4
          %s1759 = int_to_ptr.vmem [resolvable:$true] %s1758
          %s1760 = sshll.u32 %s1757, 4
          %s1761 = int_to_ptr.hbm [resolvable:$true] %s1760
          %1766 = dma.vmem_to_hbm [thread:$0]  %s1759, 512, %s1761, %s1744, 128, 128, 8
        $region96: #{tpu_custom_call.1} parent=63 // pred_fallthru
          _
      $region64: #{tpu_custom_call.1} parent=5 // pred_fallthru
        _
      %p1767 = scmp.le.s32.totalorder 2, %s28
      // Predicated region
      $region97: #{tpu_custom_call.1} parent=5 // pred_check
        %p1768 = pneg %p1767
      $region98: #{tpu_custom_call.1} parent=5 // pred_check_branch
        %1770 = sbr.rel (%p1768) target = $region100
      $region99: #{tpu_custom_call.1} parent=5 // pred_region
        %s1771 = ssub.s32 %s28, 2
        // Predicated region
        $region101: #{tpu_custom_call.1} parent=99 // pred_check
          %p1772 = pneg %p323
        $region102: #{tpu_custom_call.1} parent=99 // pred_check_branch
          %1774 = sbr.rel (%p1772) target = $region104
        $region103: #{tpu_custom_call.1} parent=99 // pred_region
          %s1775 = sand.u32 %s308, 1
          %s1776 = scalar_lea.sflag [#allocation5], %s1775
          %s1777 = sand.u32 %s308, 1
          %s1778 = smul.addr %s1777, 32
          %s1779 = scalar_lea.vmem [#allocation15], %s1778
          %1781 = dma.done %s1776, 512
        $region104: #{tpu_custom_call.1} parent=99 // pred_fallthru
          _
      $region100: #{tpu_custom_call.1} parent=5 // pred_fallthru
        _
    $region6: #{tpu_custom_call.1} parent=1 // loop_footer
      %s32 = sadd.s32 1, %s28
    $region7: #{tpu_custom_call.1} parent=1 // loop_footer_branch
      %27 = sbr.rel target = $region3
    $region8: #{tpu_custom_call.1} parent=1 // loop_exit
      _
    %1782 = vsyncpa [#allocation4], 1
    %s1783 = scalar_lea.sflag [#allocation4], 1
    %1784 = vsyncpa %s1783, 1
    %1785 = vsyncpa [#allocation7], 1
    %s1786 = scalar_lea.sflag [#allocation7], 1
    %1787 = vsyncpa %s1786, 1
    %1788 = vsyncpa [#allocation10], 1
    %1789 = vsyncpa [#allocation13], 1
    %1790 = vsyncpa [#allocation5], 1
    %s1791 = scalar_lea.sflag [#allocation5], 1
    %1792 = vsyncpa %s1791, 1

</llo_original>
